<compile_context>
chip_gen: v6e
topology: v6e:2x2x1
jax: 0.10.0
libtpu: 0.0.40
codegen_flags: <defaults>
</compile_context>

<pallas_src>
import functools

import jax
import jax.numpy as jnp
from jax.experimental import pallas as pl
from jax.experimental.pallas import tpu as pltpu


# ----------------------------- fused Pallas kernel -----------------------------

def _fused_pooled_attn_kernel(x_ref, qkvw_ref, qkvb_ref, pw_ref, pb_ref,
                              o_ref, q_s, *, num_heads, height, width):
    # x_ref   : (1, Nkv, C_in)  input tokens of this batch element (row = h*W + w)
    # qkvw_ref: (C_in, 3C) bf16 packed QKV weight, q columns pre-scaled by 1/sqrt(d)
    # qkvb_ref: (1, 3C)    f32  packed QKV bias,   q part pre-scaled
    # pw_ref  : (C, C)     bf16 output projection weight
    # pb_ref  : (1, C)     f32  output projection bias
    # o_ref   : (1, Nq, C) f32  projected, pooled attention output
    # q_s     : (Nkv, C)   f32  VMEM scratch holding q for the in-VMEM pooling
    C = pw_ref.shape[0]
    d = C // num_heads
    hp, wp = height // 2, width // 2
    nq = hp * wp
    nkv = height * width

    # ---- fused QKV projection (bf16 MXU operands, f32 accumulation) ----
    x = x_ref[0].astype(jnp.bfloat16)                                   # (nkv, c_in)
    qkv = jnp.dot(x, qkvw_ref[...],
                  preferred_element_type=jnp.float32) + qkvb_ref[...]   # (nkv, 3C) f32

    # static lane-range slices of the packed channel axis (no HBM round trip)
    k = qkv[:, C:2 * C].astype(jnp.bfloat16)                            # (nkv, C)
    v = qkv[:, 2 * C:3 * C].astype(jnp.bfloat16)                        # (nkv, C)

    # ---- 2x2 max-pool of q, entirely in VMEM, in f32 ----
    q_s[...] = qkv[:, 0:C]                                  # rows ordered h*W + w
    # W-neighbours are adjacent rows -> sublane-strided loads (stride 2)
    qw = jnp.maximum(q_s[pl.ds(0, nkv // 2, stride=2), :],
                     q_s[pl.ds(1, nkv // 2, stride=2), :])  # (H*Wp, C), row = h*Wp + j
    # H-neighbours are Wp rows apart -> trivial outer-dim split + elementwise max
    qw = qw.reshape(hp, 2, wp, C)
    qp = jnp.maximum(qw[:, 0], qw[:, 1]).reshape(nq, C)     # (nq, C) f32, scale folded in
    qp = qp.astype(jnp.bfloat16)

    # ---- per-head attention + per-head output-projection accumulation ----
    pw = pw_ref[...]                                        # (C, C) bf16
    acc = jnp.zeros((nq, C), jnp.float32)
    for h in range(num_heads):                              # static unrolled head loop
        sl = slice(h * d, (h + 1) * d)
        s = jnp.einsum("qd,kd->qk", qp[:, sl], k[:, sl],
                       preferred_element_type=jnp.float32)  # (nq, nkv) f32
        m = jnp.max(s, axis=-1, keepdims=True)
        p = jnp.exp(s - m)
        denom = jnp.sum(p, axis=-1, keepdims=True)
        p = (p * pl.reciprocal(denom, approx=True)).astype(jnp.bfloat16)
        o_h = jnp.dot(p, v[:, sl], preferred_element_type=jnp.float32)   # (nq, d)
        # projection of this head: sublane row-slice of pw (no lane concat of heads)
        acc = acc + jnp.dot(o_h.astype(jnp.bfloat16), pw[sl, :],
                            preferred_element_type=jnp.float32)

    o_ref[0] = (acc + pb_ref[...]).astype(o_ref.dtype)


def pooled_self_attention(params, x_bhwc, *, num_heads):
    """Forward pass matching PooledSelfAttention.forward (BHWC in/out)."""
    b, h, w, c_in = x_bhwc.shape
    c_out = params["qkv_w"].shape[1] // 3
    d = c_out // num_heads
    hp, wp = h // 2, w // 2
    nq, nkv = hp * wp, h * w
    scale = 1.0 / float(d) ** 0.5

    # Fold the softmax scale into the q columns (in f32), then cast weights to
    # bf16 once outside the kernel (max-pooling commutes with positive scaling).
    col_scale = jnp.concatenate([jnp.full((c_out,), scale, jnp.float32),
                                 jnp.ones((2 * c_out,), jnp.float32)])
    qkv_w = (params["qkv_w"] * col_scale).astype(jnp.bfloat16)    # (c_in, 3*c_out)
    qkv_b = (params["qkv_b"] * col_scale).reshape(1, 3 * c_out)   # f32
    proj_w = params["proj_w"].astype(jnp.bfloat16)                # (c_out, c_out)
    proj_b = params["proj_b"].reshape(1, c_out)                   # f32

    x_flat = x_bhwc.reshape(b, nkv, c_in)     # free metadata reshape (no HBM pass)

    kernel = functools.partial(_fused_pooled_attn_kernel,
                               num_heads=num_heads, height=h, width=w)
    out = pl.pallas_call(
        kernel,
        out_shape=jax.ShapeDtypeStruct((b, nq, c_out), jnp.float32),
        grid=(b,),
        in_specs=[
            pl.BlockSpec((1, nkv, c_in), lambda i: (i, 0, 0)),
            pl.BlockSpec((c_in, 3 * c_out), lambda i: (0, 0)),
            pl.BlockSpec((1, 3 * c_out), lambda i: (0, 0)),
            pl.BlockSpec((c_out, c_out), lambda i: (0, 0)),
            pl.BlockSpec((1, c_out), lambda i: (0, 0)),
        ],
        out_specs=pl.BlockSpec((1, nq, c_out), lambda i: (i, 0, 0)),
        scratch_shapes=[pltpu.VMEM((nkv, c_out), jnp.float32)],
        compiler_params=pltpu.CompilerParams(
            dimension_semantics=("parallel",)),
    )(x_flat, qkv_w, qkv_b, proj_w, proj_b)
    return out.reshape(b, hp, wp, c_out)


# ------------------------- module (params + forward) -------------------------

def init_params(key, num_heads, c_in, c_out=None):
    """Deterministic synthetic init of the PooledSelfAttention parameters."""
    if c_out is None:
        c_out = c_in * 2
    assert c_out % num_heads == 0
    k1, k2, k3, k4 = jax.random.split(key, 4)
    # weights stored as (in, out) so forward is x @ w + b (same math as nn.Linear)
    params = dict(
        qkv_w=jax.random.normal(k1, (c_in, 3 * c_out), jnp.float32) * 0.02,
        qkv_b=jax.random.normal(k2, (3 * c_out,), jnp.float32) * 0.02,
        proj_w=jax.random.normal(k3, (c_out, c_out), jnp.float32) * 0.02,
        proj_b=jax.random.normal(k4, (c_out,), jnp.float32) * 0.02,
    )
    return params, c_out


# ------------------------------ pure-JAX reference ------------------------------

def reference(params, x, num_heads):
    b, h, w, c_in = x.shape
    c_out = params["qkv_w"].shape[1] // 3
    d = c_out // num_heads
    hp, wp = h // 2, w // 2
    qkv = x.reshape(b * h * w, c_in) @ params["qkv_w"] + params["qkv_b"]
    qkv = qkv.reshape(b, h * w, 3, num_heads, d)
    q, k, v = qkv[:, :, 0], qkv[:, :, 1], qkv[:, :, 2]
    q_img = q.reshape(b, h, w, num_heads * d)
    q_pool = jnp.max(q_img.reshape(b, hp, 2, wp, 2, num_heads * d), axis=(2, 4))
    qh = q_pool.reshape(b, hp * wp, num_heads, d).transpose(0, 2, 1, 3)
    kh = k.transpose(0, 2, 1, 3)
    vh = v.transpose(0, 2, 1, 3)
    s = jnp.einsum("bhqd,bhkd->bhqk", qh, kh) * (1.0 / float(d) ** 0.5)
    p = jax.nn.softmax(s, axis=-1)
    o = jnp.einsum("bhqk,bhkd->bhqd", p, vh)
    o = o.transpose(0, 2, 1, 3).reshape(b * hp * wp, c_out)
    o = o @ params["proj_w"] + params["proj_b"]
    return o.reshape(b, hp, wp, c_out)


# ------------------------------------ main ------------------------------------

if __name__ == "__main__":
    # TPU-friendly small config: C_OUT = 2*C_IN = 128 (lane-dense output),
    # Wp = W//2 = 8 (full sublane tiles for the in-kernel pooling).
    B, H, W, C_IN, HEADS = 2, 16, 16, 64, 2

    key = jax.random.PRNGKey(0)
    kx, kp = jax.random.split(key)
    x = jax.random.normal(kx, (B, H, W, C_IN), jnp.float32)
    params, c_out = init_params(kp, HEADS, C_IN)

    fwd = jax.jit(functools.partial(pooled_self_attention, num_heads=HEADS))
    out = fwd(params, x)
    out = jax.block_until_ready(out)

    assert out.shape == (B, H // 2, W // 2, c_out), out.shape
    ref = reference(params, x, HEADS)
    # tolerance loosened slightly for bf16 MXU operands (f32 accumulation)
    assert jnp.allclose(out, ref, rtol=2e-2, atol=2e-2), float(
        jnp.max(jnp.abs(out - ref)))

    print("KERNEL_OK")
</pallas_src>

<mosaic_0001>
module attributes {stable_mosaic.version = 11 : i64} {
  func.func @_fused_pooled_attn_kernel(%arg0: i32, %arg1: memref<1x256x64xf32, #tpu.memory_space<vmem>>, %arg2: memref<64x384xbf16, #tpu.memory_space<vmem>>, %arg3: memref<1x384xf32, #tpu.memory_space<vmem>>, %arg4: memref<128x128xbf16, #tpu.memory_space<vmem>>, %arg5: memref<1x128xf32, #tpu.memory_space<vmem>>, %arg6: memref<1x64x128xf32, #tpu.memory_space<vmem>>, %arg7: memref<256x128xf32, #tpu.memory_space<vmem>>) attributes {dimension_semantics = [#tpu.dimension_semantics<parallel>], iteration_bounds = array<i64: 2>, scalar_prefetch = 0 : i64, scratch_operands = 1 : i64, tpu.core_type = #tpu.core_type<tc>, window_params = [{transform_indices = @transform_0, window_bounds = array<i64: 1, 256, 64>}, {pipeline_mode = #tpu.pipeline_mode<synchronous>, transform_indices = @transform_1, window_bounds = array<i64: 64, 384>}, {pipeline_mode = #tpu.pipeline_mode<synchronous>, transform_indices = @transform_2, window_bounds = array<i64: 1, 384>}, {pipeline_mode = #tpu.pipeline_mode<synchronous>, transform_indices = @transform_3, window_bounds = array<i64: 128, 128>}, {pipeline_mode = #tpu.pipeline_mode<synchronous>, transform_indices = @transform_4, window_bounds = array<i64: 1, 128>}, {transform_indices = @transform_5, window_bounds = array<i64: 1, 64, 128>}]} {
    %c0 = arith.constant 0 : index
    %c0_0 = arith.constant 0 : index
    %c0_1 = arith.constant 0 : index
    %0 = vector.load %arg1[%c0, %c0_0, %c0_1] : memref<1x256x64xf32, #tpu.memory_space<vmem>>, vector<1x256x64xf32>
    %1 = vector.shape_cast %0 : vector<1x256x64xf32> to vector<256x64xf32>
    %2 = arith.truncf %1 : vector<256x64xf32> to vector<256x64xbf16>
    %c0_2 = arith.constant 0 : index
    %c0_3 = arith.constant 0 : index
    %3 = vector.load %arg2[%c0_2, %c0_3] : memref<64x384xbf16, #tpu.memory_space<vmem>>, vector<64x384xbf16>
    %cst = arith.constant dense<0.000000e+00> : vector<256x384xf32>
    %4 = tpu.matmul %2, %3, %cst {dimension_numbers = #tpu.dot_dimension_numbers<[1], [0], [0], [1], [0, 0, 1, 1], [], []>} : vector<256x64xbf16>, vector<64x384xbf16>, vector<256x384xf32> -> vector<256x384xf32>
    %c0_4 = arith.constant 0 : index
    %c0_5 = arith.constant 0 : index
    %5 = vector.load %arg3[%c0_4, %c0_5] : memref<1x384xf32, #tpu.memory_space<vmem>>, vector<1x384xf32>
    %6 = vector.broadcast %5 : vector<1x384xf32> to vector<256x384xf32>
    %7 = arith.addf %4, %6 : vector<256x384xf32>
    %8 = vector.extract_strided_slice %7 {offsets = [0, 128], sizes = [256, 128], strides = [1, 1]} : vector<256x384xf32> to vector<256x128xf32>
    %9 = arith.truncf %8 : vector<256x128xf32> to vector<256x128xbf16>
    %10 = vector.extract_strided_slice %7 {offsets = [0, 256], sizes = [256, 128], strides = [1, 1]} : vector<256x384xf32> to vector<256x128xf32>
    %11 = arith.truncf %10 : vector<256x128xf32> to vector<256x128xbf16>
    %12 = vector.extract_strided_slice %7 {offsets = [0, 0], sizes = [256, 128], strides = [1, 1]} : vector<256x384xf32> to vector<256x128xf32>
    %c0_6 = arith.constant 0 : index
    %c0_7 = arith.constant 0 : index
    %13 = vector.load %arg7[%c0_6, %c0_7] : memref<256x128xf32, #tpu.memory_space<vmem>>, vector<256x128xf32>
    tpu.vector_store %arg7[%c0_6, %c0_7], %12 {strides = array<i32>} : memref<256x128xf32, #tpu.memory_space<vmem>>, vector<256x128xf32>,
    %c0_8 = arith.constant 0 : index
    %c0_9 = arith.constant 0 : index
    %14 = tpu.strided_load %arg7[%c0_8, %c0_9] {strides = array<i32: 2, 1>} : memref<256x128xf32, #tpu.memory_space<vmem>>, vector<128x128xf32>
    %c1 = arith.constant 1 : index
    %c0_10 = arith.constant 0 : index
    %15 = tpu.strided_load %arg7[%c1, %c0_10] {strides = array<i32: 2, 1>} : memref<256x128xf32, #tpu.memory_space<vmem>>, vector<128x128xf32>
    %16 = arith.maximumf %14, %15 : vector<128x128xf32>
    %17 = vector.shape_cast %16 : vector<128x128xf32> to vector<8x2x8x128xf32>
    %18 = vector.extract_strided_slice %17 {offsets = [0, 0, 0, 0], sizes = [8, 1, 8, 128], strides = [1, 1, 1, 1]} : vector<8x2x8x128xf32> to vector<8x1x8x128xf32>
    %19 = vector.shape_cast %18 : vector<8x1x8x128xf32> to vector<8x8x128xf32>
    %20 = vector.extract_strided_slice %17 {offsets = [0, 1, 0, 0], sizes = [8, 1, 8, 128], strides = [1, 1, 1, 1]} : vector<8x2x8x128xf32> to vector<8x1x8x128xf32>
    %21 = vector.shape_cast %20 : vector<8x1x8x128xf32> to vector<8x8x128xf32>
    %22 = arith.maximumf %19, %21 : vector<8x8x128xf32>
    %23 = vector.shape_cast %22 : vector<8x8x128xf32> to vector<64x128xf32>
    %24 = arith.truncf %23 : vector<64x128xf32> to vector<64x128xbf16>
    %c0_11 = arith.constant 0 : index
    %c0_12 = arith.constant 0 : index
    %25 = vector.load %arg4[%c0_11, %c0_12] : memref<128x128xbf16, #tpu.memory_space<vmem>>, vector<128x128xbf16>
    %cst_13 = arith.constant 0.000000e+00 : f32
    %26 = vector.broadcast %cst_13 : f32 to vector<64x128xf32>
    %27 = vector.extract_strided_slice %24 {offsets = [0, 0], sizes = [64, 64], strides = [1, 1]} : vector<64x128xbf16> to vector<64x64xbf16>
    %28 = vector.extract_strided_slice %9 {offsets = [0, 0], sizes = [256, 64], strides = [1, 1]} : vector<256x128xbf16> to vector<256x64xbf16>
    "tpu.trace_start"() <{level = 10 : i32, message = "qd,kd->qk"}> : () -> ()
    %cst_14 = arith.constant dense<0.000000e+00> : vector<64x256xf32>
    %29 = tpu.matmul %27, %28, %cst_14 {dimension_numbers = #tpu.dot_dimension_numbers<[1], [1], [0], [0], [0, 0, 1, 0], [], []>} : vector<64x64xbf16>, vector<256x64xbf16>, vector<64x256xf32> -> vector<64x256xf32>
    "tpu.trace_stop"() : () -> ()
    %cst_15 = arith.constant dense<0xFF800000> : vector<64xf32>
    %30 = vector.multi_reduction <maximumf>, %29, %cst_15 [1] : vector<64x256xf32> to vector<64xf32>
    %31 = vector.shape_cast %30 : vector<64xf32> to vector<64x1xf32>
    %32 = vector.broadcast %31 : vector<64x1xf32> to vector<64x256xf32>
    %33 = arith.subf %29, %32 : vector<64x256xf32>
    %34 = math.exp %33 : vector<64x256xf32>
    %cst_16 = arith.constant dense<0.000000e+00> : vector<64xf32>
    %35 = vector.multi_reduction <add>, %34, %cst_16 [1] : vector<64x256xf32> to vector<64xf32>
    %36 = vector.shape_cast %35 : vector<64xf32> to vector<64x1xf32>
    %37 = tpu.reciprocal %36 {approx = true} : vector<64x1xf32> -> vector<64x1xf32>
    %38 = vector.broadcast %37 : vector<64x1xf32> to vector<64x256xf32>
    %39 = arith.mulf %34, %38 : vector<64x256xf32>
    %40 = arith.truncf %39 : vector<64x256xf32> to vector<64x256xbf16>
    %41 = vector.extract_strided_slice %11 {offsets = [0, 0], sizes = [256, 64], strides = [1, 1]} : vector<256x128xbf16> to vector<256x64xbf16>
    %cst_17 = arith.constant dense<0.000000e+00> : vector<64x64xf32>
    %42 = tpu.matmul %40, %41, %cst_17 {dimension_numbers = #tpu.dot_dimension_numbers<[1], [0], [0], [1], [0, 0, 1, 1], [], []>} : vector<64x256xbf16>, vector<256x64xbf16>, vector<64x64xf32> -> vector<64x64xf32>
    %43 = arith.truncf %42 : vector<64x64xf32> to vector<64x64xbf16>
    %44 = vector.extract_strided_slice %25 {offsets = [0, 0], sizes = [64, 128], strides = [1, 1]} : vector<128x128xbf16> to vector<64x128xbf16>
    %cst_18 = arith.constant dense<0.000000e+00> : vector<64x128xf32>
    %45 = tpu.matmul %43, %44, %cst_18 {dimension_numbers = #tpu.dot_dimension_numbers<[1], [0], [0], [1], [0, 0, 1, 1], [], []>} : vector<64x64xbf16>, vector<64x128xbf16>, vector<64x128xf32> -> vector<64x128xf32>
    %46 = arith.addf %26, %45 : vector<64x128xf32>
    %47 = vector.extract_strided_slice %24 {offsets = [0, 64], sizes = [64, 64], strides = [1, 1]} : vector<64x128xbf16> to vector<64x64xbf16>
    %48 = vector.extract_strided_slice %9 {offsets = [0, 64], sizes = [256, 64], strides = [1, 1]} : vector<256x128xbf16> to vector<256x64xbf16>
    "tpu.trace_start"() <{level = 10 : i32, message = "qd,kd->qk"}> : () -> ()
    %cst_19 = arith.constant dense<0.000000e+00> : vector<64x256xf32>
    %49 = tpu.matmul %47, %48, %cst_19 {dimension_numbers = #tpu.dot_dimension_numbers<[1], [1], [0], [0], [0, 0, 1, 0], [], []>} : vector<64x64xbf16>, vector<256x64xbf16>, vector<64x256xf32> -> vector<64x256xf32>
    "tpu.trace_stop"() : () -> ()
    %cst_20 = arith.constant dense<0xFF800000> : vector<64xf32>
    %50 = vector.multi_reduction <maximumf>, %49, %cst_20 [1] : vector<64x256xf32> to vector<64xf32>
    %51 = vector.shape_cast %50 : vector<64xf32> to vector<64x1xf32>
    %52 = vector.broadcast %51 : vector<64x1xf32> to vector<64x256xf32>
    %53 = arith.subf %49, %52 : vector<64x256xf32>
    %54 = math.exp %53 : vector<64x256xf32>
    %cst_21 = arith.constant dense<0.000000e+00> : vector<64xf32>
    %55 = vector.multi_reduction <add>, %54, %cst_21 [1] : vector<64x256xf32> to vector<64xf32>
    %56 = vector.shape_cast %55 : vector<64xf32> to vector<64x1xf32>
    %57 = tpu.reciprocal %56 {approx = true} : vector<64x1xf32> -> vector<64x1xf32>
    %58 = vector.broadcast %57 : vector<64x1xf32> to vector<64x256xf32>
    %59 = arith.mulf %54, %58 : vector<64x256xf32>
    %60 = arith.truncf %59 : vector<64x256xf32> to vector<64x256xbf16>
    %61 = vector.extract_strided_slice %11 {offsets = [0, 64], sizes = [256, 64], strides = [1, 1]} : vector<256x128xbf16> to vector<256x64xbf16>
    %cst_22 = arith.constant dense<0.000000e+00> : vector<64x64xf32>
    %62 = tpu.matmul %60, %61, %cst_22 {dimension_numbers = #tpu.dot_dimension_numbers<[1], [0], [0], [1], [0, 0, 1, 1], [], []>} : vector<64x256xbf16>, vector<256x64xbf16>, vector<64x64xf32> -> vector<64x64xf32>
    %63 = arith.truncf %62 : vector<64x64xf32> to vector<64x64xbf16>
    %64 = vector.extract_strided_slice %25 {offsets = [64, 0], sizes = [64, 128], strides = [1, 1]} : vector<128x128xbf16> to vector<64x128xbf16>
    %cst_23 = arith.constant dense<0.000000e+00> : vector<64x128xf32>
    %65 = tpu.matmul %63, %64, %cst_23 {dimension_numbers = #tpu.dot_dimension_numbers<[1], [0], [0], [1], [0, 0, 1, 1], [], []>} : vector<64x64xbf16>, vector<64x128xbf16>, vector<64x128xf32> -> vector<64x128xf32>
    %66 = arith.addf %46, %65 : vector<64x128xf32>
    %c0_24 = arith.constant 0 : index
    %c0_25 = arith.constant 0 : index
    %67 = vector.load %arg5[%c0_24, %c0_25] : memref<1x128xf32, #tpu.memory_space<vmem>>, vector<1x128xf32>
    %68 = vector.broadcast %67 : vector<1x128xf32> to vector<64x128xf32>
    %69 = arith.addf %66, %68 : vector<64x128xf32>
    %c0_26 = arith.constant 0 : index
    %c0_27 = arith.constant 0 : index
    %c0_28 = arith.constant 0 : index
    %70 = vector.load %arg6[%c0_26, %c0_27, %c0_28] : memref<1x64x128xf32, #tpu.memory_space<vmem>>, vector<1x64x128xf32>
    %71 = vector.shape_cast %70 : vector<1x64x128xf32> to vector<64x128xf32>
    %72 = vector.shape_cast %69 : vector<64x128xf32> to vector<1x64x128xf32>
    tpu.vector_store %arg6[%c0_26, %c0_27, %c0_28], %72 {strides = array<i32>} : memref<1x64x128xf32, #tpu.memory_space<vmem>>, vector<1x64x128xf32>,
    return
  }
  func.func @transform_0(%arg0: i32) -> (i32, i32, i32) {
    %c0_i32 = arith.constant 0 : i32
    %c0_i32_0 = arith.constant 0 : i32
    %c0_i32_1 = arith.constant 0 : i32
    return %arg0, %c0_i32, %c0_i32_0 : i32, i32, i32
  }
  func.func @transform_1(%arg0: i32) -> (i32, i32) {
    %c0_i32 = arith.constant 0 : i32
    %c0_i32_0 = arith.constant 0 : i32
    %c0_i32_1 = arith.constant 0 : i32
    return %c0_i32, %c0_i32_0 : i32, i32
  }
  func.func @transform_2(%arg0: i32) -> (i32, i32) {
    %c0_i32 = arith.constant 0 : i32
    %c0_i32_0 = arith.constant 0 : i32
    %c0_i32_1 = arith.constant 0 : i32
    return %c0_i32, %c0_i32_0 : i32, i32
  }
  func.func @transform_3(%arg0: i32) -> (i32, i32) {
    %c0_i32 = arith.constant 0 : i32
    %c0_i32_0 = arith.constant 0 : i32
    %c0_i32_1 = arith.constant 0 : i32
    return %c0_i32, %c0_i32_0 : i32, i32
  }
  func.func @transform_4(%arg0: i32) -> (i32, i32) {
    %c0_i32 = arith.constant 0 : i32
    %c0_i32_0 = arith.constant 0 : i32
    %c0_i32_1 = arith.constant 0 : i32
    return %c0_i32, %c0_i32_0 : i32, i32
  }
  func.func @transform_5(%arg0: i32) -> (i32, i32, i32) {
    %c0_i32 = arith.constant 0 : i32
    %c0_i32_0 = arith.constant 0 : i32
    %c0_i32_1 = arith.constant 0 : i32
    return %arg0, %c0_i32, %c0_i32_0 : i32, i32, i32
  }
}

</mosaic_0001>

<llo_original>
// kernel: mul.9
$region0: #{mul.9}
  #allocation4 [shape = 's32[1]{0}', space=sflag, size = 0x4, scoped, tag = 'scoped memory for mul.9']
  %s0 = inlined_call_operand.hbm [shape: f32[384], index: 0, kind: input, shape index: {}]
  %s1 = inlined_call_operand.hbm [shape: f32[384], index: 1, kind: input, shape index: {}]
  %s2 = inlined_call_operand.vmem [shape: f32[384], index: 2, kind: output, shape index: {}]
  $region1: #{mul.9} parent=0
    #allocation0 [shape = 'u8[2048]{0}', space=vmem, size = 0x800, scoped, tag = 'operand span for operand 0']
    #allocation1 [shape = 's32[1]{0}', space=sflag, size = 0x4, scoped, tag = 'scoped memory for mul.9']
    #allocation2 [shape = 'u8[2048]{0}', space=vmem, size = 0x800, scoped, tag = 'operand span for operand 1']
    #allocation3 [shape = 's32[1]{0}', space=sflag, size = 0x4, scoped, tag = 'scoped memory for mul.9']
    %3 = vsyncpa [#allocation1], 0
    %4 = vsyncpa [#allocation3], 0
    %s6 = ssub.s32 64, 64
    %7 = vsyncadd [#allocation1], %s6
    %s9 = sshll.u32 [#allocation0], 4
    %s10 = int_to_ptr.vmem [resolvable:$true] %s9
    %12 = dma.hbm_to_vmem [thread:$0]  %s0, 64, %s10, [#allocation1]
    %s14 = ssub.s32 64, 64
    %15 = vsyncadd [#allocation3], %s14
    %s17 = sshll.u32 [#allocation2], 4
    %s18 = int_to_ptr.vmem [resolvable:$true] %s17
    %20 = dma.hbm_to_vmem [thread:$0]  %s1, 64, %s18, [#allocation3]
    %21 = dma.done [#allocation1], 64
    %22 = dma.done [#allocation3], 64
    %v23 = vld [vmem:[#allocation0] sm:$0x7]
    %v24 = vld [vmem:[#allocation2] sm:$0x7]
    %25 = xla_tuple %v23, %v24
    %26 = xla_tuple %25
    %v27 = vmul.f32 %v23, %v24
    %28 = xla_tuple %v27
    %29 = vst [vmem:[%s2] sm:$0xf] %v27
    %30 = vsyncpa [#allocation1], 1
    %31 = vsyncpa [#allocation3], 1

// kernel: pooled_self_attention.1
$region0: #{pooled_self_attention.1}
  #allocation0 [shape = 'u32[]', space=smem, size = 0x4, offset = 0x4, fixed_abs, tag = 'smem constant byte address 0x4 - core index']
  #allocation1 [shape = 'u32[144,128]{1,0:T(1,128)}', space=vmem, size = 0x12000, scoped, tag = 'internal scratch']
  #allocation2 [shape = 'f32[256,128]{1,0:T(8,128)}', space=vmem, size = 0x20000, scoped, tag = 'scratch operand']
  %s0 = inlined_call_operand.vmem [shape: f32[2,256,64], index: 0, kind: input, shape index: {}]
  %s1 = inlined_call_operand.vmem [shape: bf16[64,384], index: 1, kind: input, shape index: {}]
  %s2 = inlined_call_operand.vmem [shape: f32[1,384], index: 2, kind: input, shape index: {}]
  %s3 = inlined_call_operand.vmem [shape: bf16[128,128], index: 3, kind: input, shape index: {}]
  %s4 = inlined_call_operand.vmem [shape: f32[1,128], index: 4, kind: input, shape index: {}]
  %s5 = inlined_call_operand.hbm [shape: f32[2,64,128], index: 5, kind: output, shape index: {}]
  %s6 = sld [smem:[#allocation0]]
  $region53: #{pooled_self_attention.1} parent=0
    _
  %s8 = ssub.s32 1, %s6
  %s9 = scalar_select 0, %s8, %s6
  $region1: #{pooled_self_attention.1} parent=0
    #allocation3 [shape = 'u8[65536]{0}', space=vmem, size = 0x10000, scoped, tag = 'output window, operand 0']
    #allocation4 [shape = 's32[2]{0}', space=sflag, size = 0x8, scoped, tag = 'scoped memory for pooled_self_attention.1']
    %10 = vsyncpa [#allocation4], 0
    %s11 = scalar_lea.sflag [#allocation4], 1
    %12 = vsyncpa %s11, 0
    loop: start=0, step=1, limit=4
    $region2: #{pooled_self_attention.1} parent=1 // loop_pre_header
      _
    $region3: #{pooled_self_attention.1} parent=1 // loop_header
      %s14 = sphi 0, %s18
      %p15 = scmp.ge.s32.totalorder %s14, 4
      %s24 = sphi 0, %s26
      %s27 = sphi 0, %s24
      %s28 = sphi 0, %s27
      %s44 = sphi 0, %s28
      %s48 = sphi 0, %s48
      %s50 = sphi 0, %s48
      %s51 = sphi 0, %s50
      %s65 = sphi 0, %s51
      %s69 = sphi 0, %s69
      %s71 = sphi 0, %s69
      %s72 = sphi 0, %s71
      %s86 = sphi 0, %s72
      %s90 = sphi 0, %s90
      %s92 = sphi 0, %s90
      %s93 = sphi 0, %s92
      %s107 = sphi 0, %s93
      %s111 = sphi 0, %s111
      %s113 = sphi 0, %s111
      %s114 = sphi 0, %s113
      %s128 = sphi 0, %s114
      %s134 = sphi 0, %s136
      %s137 = sphi 0, %s134
      %s138 = sphi 0, %s137
      %s154 = sphi 0, %s138
    $region4: #{pooled_self_attention.1} parent=1 // loop_header_branch
      %17 = sbr.rel (%p15) target = $region8
    $region5: #{pooled_self_attention.1} parent=1 // loop_body
      %s19 = ssub.s32 %s14, 1
      %s20 = ssub.s32 %s14, 2
      %s21 = sadd.s32 %s14, 1
      %s22 = ssub.s32 %s14, %s21
      %p23 = scmp.eq.s32.totalorder %s22, 0
      %s25 = sadd.s32 %s24, 1
      %s26 = scalar_select %p23, %s24, %s25
      %p29 = pneg %p23
      %p30 = scmp.eq.s32.totalorder %s14, 1
      %p31 = por %p29, %p30
      %p32 = scmp.ne.s32.totalorder %s24, %s27
      %p33 = scmp.eq.s32.totalorder %s14, 0
      %p34 = por %p32, %p33
      %p35 = scmp.ne.s32.totalorder %s24, %s27
      %p36 = scmp.eq.s32.totalorder %s19, 1
      %p37 = por %p35, %p36
      %p38 = scmp.ne.s32.totalorder %s27, %s28
      %p39 = scmp.eq.s32.totalorder %s19, 0
      %p40 = por %p38, %p39
      %p41 = scmp.ne.s32.totalorder %s27, %s28
      %p42 = scmp.eq.s32.totalorder %s20, 1
      %p43 = por %p41, %p42
      %p45 = scmp.ne.s32.totalorder %s28, %s44
      %p46 = scmp.eq.s32.totalorder %s20, 0
      %p47 = por %p45, %p46
      %s49 = sadd.s32 %s48, 1
      %p52 = scmp.eq.s32.totalorder %s14, 1
      %p53 = scmp.ne.s32.totalorder %s48, %s50
      %p54 = scmp.eq.s32.totalorder %s14, 0
      %p55 = por %p53, %p54
      %p56 = scmp.ne.s32.totalorder %s48, %s50
      %p57 = scmp.eq.s32.totalorder %s19, 1
      %p58 = por %p56, %p57
      %p59 = scmp.ne.s32.totalorder %s50, %s51
      %p60 = scmp.eq.s32.totalorder %s19, 0
      %p61 = por %p59, %p60
      %p62 = scmp.ne.s32.totalorder %s50, %s51
      %p63 = scmp.eq.s32.totalorder %s20, 1
      %p64 = por %p62, %p63
      %p66 = scmp.ne.s32.totalorder %s51, %s65
      %p67 = scmp.eq.s32.totalorder %s20, 0
      %p68 = por %p66, %p67
      %s70 = sadd.s32 %s69, 1
      %p73 = scmp.eq.s32.totalorder %s14, 1
      %p74 = scmp.ne.s32.totalorder %s69, %s71
      %p75 = scmp.eq.s32.totalorder %s14, 0
      %p76 = por %p74, %p75
      %p77 = scmp.ne.s32.totalorder %s69, %s71
      %p78 = scmp.eq.s32.totalorder %s19, 1
      %p79 = por %p77, %p78
      %p80 = scmp.ne.s32.totalorder %s71, %s72
      %p81 = scmp.eq.s32.totalorder %s19, 0
      %p82 = por %p80, %p81
      %p83 = scmp.ne.s32.totalorder %s71, %s72
      %p84 = scmp.eq.s32.totalorder %s20, 1
      %p85 = por %p83, %p84
      %p87 = scmp.ne.s32.totalorder %s72, %s86
      %p88 = scmp.eq.s32.totalorder %s20, 0
      %p89 = por %p87, %p88
      %s91 = sadd.s32 %s90, 1
      %p94 = scmp.eq.s32.totalorder %s14, 1
      %p95 = scmp.ne.s32.totalorder %s90, %s92
      %p96 = scmp.eq.s32.totalorder %s14, 0
      %p97 = por %p95, %p96
      %p98 = scmp.ne.s32.totalorder %s90, %s92
      %p99 = scmp.eq.s32.totalorder %s19, 1
      %p100 = por %p98, %p99
      %p101 = scmp.ne.s32.totalorder %s92, %s93
      %p102 = scmp.eq.s32.totalorder %s19, 0
      %p103 = por %p101, %p102
      %p104 = scmp.ne.s32.totalorder %s92, %s93
      %p105 = scmp.eq.s32.totalorder %s20, 1
      %p106 = por %p104, %p105
      %p108 = scmp.ne.s32.totalorder %s93, %s107
      %p109 = scmp.eq.s32.totalorder %s20, 0
      %p110 = por %p108, %p109
      %s112 = sadd.s32 %s111, 1
      %p115 = scmp.eq.s32.totalorder %s14, 1
      %p116 = scmp.ne.s32.totalorder %s111, %s113
      %p117 = scmp.eq.s32.totalorder %s14, 0
      %p118 = por %p116, %p117
      %p119 = scmp.ne.s32.totalorder %s111, %s113
      %p120 = scmp.eq.s32.totalorder %s19, 1
      %p121 = por %p119, %p120
      %p122 = scmp.ne.s32.totalorder %s113, %s114
      %p123 = scmp.eq.s32.totalorder %s19, 0
      %p124 = por %p122, %p123
      %p125 = scmp.ne.s32.totalorder %s113, %s114
      %p126 = scmp.eq.s32.totalorder %s20, 1
      %p127 = por %p125, %p126
      %p129 = scmp.ne.s32.totalorder %s114, %s128
      %p130 = scmp.eq.s32.totalorder %s20, 0
      %p131 = por %p129, %p130
      %s132 = ssub.s32 %s14, %s21
      %p133 = scmp.eq.s32.totalorder %s132, 0
      %s135 = sadd.s32 %s134, 1
      %s136 = scalar_select %p133, %s134, %s135
      %p139 = pneg %p133
      %p140 = scmp.eq.s32.totalorder %s14, 1
      %p141 = por %p139, %p140
      %p142 = scmp.ne.s32.totalorder %s134, %s137
      %p143 = scmp.eq.s32.totalorder %s14, 0
      %p144 = por %p142, %p143
      %p145 = scmp.ne.s32.totalorder %s134, %s137
      %p146 = scmp.eq.s32.totalorder %s19, 1
      %p147 = por %p145, %p146
      %p148 = scmp.ne.s32.totalorder %s137, %s138
      %p149 = scmp.eq.s32.totalorder %s19, 0
      %p150 = por %p148, %p149
      %p151 = scmp.ne.s32.totalorder %s137, %s138
      %p152 = scmp.eq.s32.totalorder %s20, 1
      %p153 = por %p151, %p152
      %p155 = scmp.ne.s32.totalorder %s138, %s154
      %p156 = scmp.eq.s32.totalorder %s20, 0
      %p157 = por %p155, %p156
      %p158 = scmp.le.s32.totalorder 1, %s14
      %p159 = scmp.lt.s32.totalorder %s14, 3
      %p160 = pnand %p158, %p159
      %p161 = pneg %p160
      // Predicated region
      $region9: #{pooled_self_attention.1} parent=5 // pred_check
        _
      $region10: #{pooled_self_attention.1} parent=5 // pred_check_branch
        %163 = sbr.rel (%p160) target = $region12
      $region11: #{pooled_self_attention.1} parent=5 // pred_region
        %s164 = ssub.s32 %s14, 1
        // Predicated region
        $region13: #{pooled_self_attention.1} parent=11 // pred_check
          %p165 = pneg %p61
        $region14: #{pooled_self_attention.1} parent=11 // pred_check_branch
          %167 = sbr.rel (%p165) target = $region16
        $region15: #{pooled_self_attention.1} parent=11 // pred_region
          _
        $region16: #{pooled_self_attention.1} parent=11 // pred_fallthru
          _
        // Predicated region
        $region17: #{pooled_self_attention.1} parent=11 // pred_check
          %p168 = pneg %p82
        $region18: #{pooled_self_attention.1} parent=11 // pred_check_branch
          %170 = sbr.rel (%p168) target = $region20
        $region19: #{pooled_self_attention.1} parent=11 // pred_region
          _
        $region20: #{pooled_self_attention.1} parent=11 // pred_fallthru
          _
        // Predicated region
        $region21: #{pooled_self_attention.1} parent=11 // pred_check
          %p171 = pneg %p103
        $region22: #{pooled_self_attention.1} parent=11 // pred_check_branch
          %173 = sbr.rel (%p171) target = $region24
        $region23: #{pooled_self_attention.1} parent=11 // pred_region
          _
        $region24: #{pooled_self_attention.1} parent=11 // pred_fallthru
          _
        // Predicated region
        $region25: #{pooled_self_attention.1} parent=11 // pred_check
          %p174 = pneg %p124
        $region26: #{pooled_self_attention.1} parent=11 // pred_check_branch
          %176 = sbr.rel (%p174) target = $region28
        $region27: #{pooled_self_attention.1} parent=11 // pred_region
          _
        $region28: #{pooled_self_attention.1} parent=11 // pred_fallthru
          _
      $region12: #{pooled_self_attention.1} parent=5 // pred_fallthru
        _
      %p177 = scmp.lt.s32.totalorder %s14, 2
      // Predicated region
      $region29: #{pooled_self_attention.1} parent=5 // pred_check
        %p178 = pneg %p177
      $region30: #{pooled_self_attention.1} parent=5 // pred_check_branch
        %180 = sbr.rel (%p178) target = $region32
      $region31: #{pooled_self_attention.1} parent=5 // pred_region
        // Predicated region
        $region33: #{pooled_self_attention.1} parent=31 // pred_check
          %p181 = pneg %p34
        $region34: #{pooled_self_attention.1} parent=31 // pred_check_branch
          %183 = sbr.rel (%p181) target = $region36
        $region35: #{pooled_self_attention.1} parent=31 // pred_region
          %p184 = scmp.lt.s32.totalorder %s14, 1
          %s185 = scalar_select %p184, %s14, 1
          %s186 = smul.addr %s185, 32
          %s187 = smul.addr %s186, 8
          %s188 = scalar_lea.vmem %s0, %s187
        $region36: #{pooled_self_attention.1} parent=31 // pred_fallthru
          _
      $region32: #{pooled_self_attention.1} parent=5 // pred_fallthru
        _
      %p189 = scmp.le.s32.totalorder 1, %s14
      %p190 = scmp.lt.s32.totalorder %s14, 3
      %p191 = pnand %p189, %p190
      %p192 = pneg %p191
      // Predicated region
      $region37: #{pooled_self_attention.1} parent=5 // pred_check
        _
      $region38: #{pooled_self_attention.1} parent=5 // pred_check_branch
        %194 = sbr.rel (%p191) target = $region40
      $region39: #{pooled_self_attention.1} parent=5 // pred_region
        %s195 = ssub.s32 %s14, 1
        %p196 = scmp.lt.s32.totalorder %s19, 1
        %s197 = scalar_select %p196, %s19, 1
        %s198 = smul.addr %s197, 32
        %s199 = smul.addr %s198, 8
        %s200 = scalar_lea.vmem %s0, %s199
        %p201 = pneg %p40
        %p202 = pneg %p37
        %p203 = pneg %p61
        %p204 = pneg %p58
        %p205 = pneg %p82
        %p206 = pneg %p79
        %p207 = pneg %p103
        %p208 = pneg %p100
        %p209 = pneg %p124
        %p210 = pneg %p121
        %p211 = pneg %p150
        %p212 = pneg %p147
        %s213 = sand.u32 %s137, 1
        %s214 = scalar_lea.sflag [#allocation4], %s213
        %s215 = sand.u32 %s137, 1
        %s216 = smul.addr %s215, 64
        %s217 = scalar_lea.vmem [#allocation3], %s216
        %p218 = scmp.lt.s32.totalorder %s19, 1
        %s219 = scalar_select %p218, %s19, 1
        %s220 = smul.addr %s219, 32
        %s221 = smul.addr %s220, 8
        %s222 = scalar_lea.vmem %s0, %s221
        %v224 = vld [vmem:[%s222] sm:$0xff]
        %v225 = vld [vmem:[%s222 + $0x8] sm:$0xff]
        %v226 = vld [vmem:[%s222 + $0x10] sm:$0xff]
        %v227 = vld [vmem:[%s222 + $0x18] sm:$0xff]
        %v228 = vld [vmem:[%s222 + $0x20] sm:$0xff]
        %v229 = vld [vmem:[%s222 + $0x28] sm:$0xff]
        %v230 = vld [vmem:[%s222 + $0x30] sm:$0xff]
        %v231 = vld [vmem:[%s222 + $0x38] sm:$0xff]
        %v232 = vld [vmem:[%s222 + $0x40] sm:$0xff]
        %v233 = vld [vmem:[%s222 + $0x48] sm:$0xff]
        %v234 = vld [vmem:[%s222 + $0x50] sm:$0xff]
        %v235 = vld [vmem:[%s222 + $0x58] sm:$0xff]
        %v236 = vld [vmem:[%s222 + $0x60] sm:$0xff]
        %v237 = vld [vmem:[%s222 + $0x68] sm:$0xff]
        %v238 = vld [vmem:[%s222 + $0x70] sm:$0xff]
        %v239 = vld [vmem:[%s222 + $0x78] sm:$0xff]
        %v240 = vld [vmem:[%s222 + $0x80] sm:$0xff]
        %v241 = vld [vmem:[%s222 + $0x88] sm:$0xff]
        %v242 = vld [vmem:[%s222 + $0x90] sm:$0xff]
        %v243 = vld [vmem:[%s222 + $0x98] sm:$0xff]
        %v244 = vld [vmem:[%s222 + $0xa0] sm:$0xff]
        %v245 = vld [vmem:[%s222 + $0xa8] sm:$0xff]
        %v246 = vld [vmem:[%s222 + $0xb0] sm:$0xff]
        %v247 = vld [vmem:[%s222 + $0xb8] sm:$0xff]
        %v248 = vld [vmem:[%s222 + $0xc0] sm:$0xff]
        %v249 = vld [vmem:[%s222 + $0xc8] sm:$0xff]
        %v250 = vld [vmem:[%s222 + $0xd0] sm:$0xff]
        %v251 = vld [vmem:[%s222 + $0xd8] sm:$0xff]
        %v252 = vld [vmem:[%s222 + $0xe0] sm:$0xff]
        %v253 = vld [vmem:[%s222 + $0xe8] sm:$0xff]
        %v254 = vld [vmem:[%s222 + $0xf0] sm:$0xff]
        %v255 = vld [vmem:[%s222 + $0xf8] sm:$0xff]
        %v256 = vpack.c.bf16 %v225, %v224
        %v257 = vpack.c.bf16 %v227, %v226
        %v258 = vpack.c.bf16 %v229, %v228
        %v259 = vpack.c.bf16 %v231, %v230
        %v260 = vpack.c.bf16 %v233, %v232
        %v261 = vpack.c.bf16 %v235, %v234
        %v262 = vpack.c.bf16 %v237, %v236
        %v263 = vpack.c.bf16 %v239, %v238
        %v264 = vpack.c.bf16 %v241, %v240
        %v265 = vpack.c.bf16 %v243, %v242
        %v266 = vpack.c.bf16 %v245, %v244
        %v267 = vpack.c.bf16 %v247, %v246
        %v268 = vpack.c.bf16 %v249, %v248
        %v269 = vpack.c.bf16 %v251, %v250
        %v270 = vpack.c.bf16 %v253, %v252
        %v271 = vpack.c.bf16 %v255, %v254
        %v272 = vld [vmem:[%s1] sm:$0xff]
        %v273 = vld [vmem:[%s1 + $0x8] sm:$0xf]
        %v274 = vld [vmem:[%s1 + $0xc] sm:$0xff]
        %v275 = vld [vmem:[%s1 + $0x14] sm:$0xf]
        %v276 = vld [vmem:[%s1 + $0x18] sm:$0xff]
        %v277 = vld [vmem:[%s1 + $0x20] sm:$0xf]
        %v278 = vld [vmem:[%s1 + $0x24] sm:$0xff]
        %v279 = vld [vmem:[%s1 + $0x2c] sm:$0xf]
        %v280 = vld [vmem:[%s1 + $0x30] sm:$0xff]
        %v281 = vld [vmem:[%s1 + $0x38] sm:$0xf]
        %v282 = vld [vmem:[%s1 + $0x3c] sm:$0xff]
        %v283 = vld [vmem:[%s1 + $0x44] sm:$0xf]
        %v284 = vld [vmem:[%s1 + $0x48] sm:$0xff]
        %v285 = vld [vmem:[%s1 + $0x50] sm:$0xf]
        %v286 = vld [vmem:[%s1 + $0x54] sm:$0xff]
        %v287 = vld [vmem:[%s1 + $0x5c] sm:$0xf]
        %v288 = vld [vmem:[%s2] sm:$0x7]
        %v290 = vlaneseq
        %v291 = vshrl.u32 %v290, 7
        %v292 = vsub.s32 0, %v291
        %v293 = vrot.slane %v288, %v292
        %v294 = vlaneseq
        %v295 = vshrl.u32 %v294, 7
        %v296 = vsub.s32 1, %v295
        %v297 = vrot.slane %v288, %v296
        %v298 = vlaneseq
        %v299 = vshrl.u32 %v298, 7
        %v300 = vsub.s32 2, %v299
        %v301 = vrot.slane %v288, %v300
        %v321 = vunpack.c.l.b16 %v272
        %v322 = vunpack.c.h.b16 %v272
        %v323 = vunpack.c.l.b16 %v273
        %v324 = vunpack.c.l.b16 %v274
        %v325 = vunpack.c.h.b16 %v274
        %v326 = vunpack.c.l.b16 %v275
        %v327 = vunpack.c.l.b16 %v276
        %v328 = vunpack.c.h.b16 %v276
        %v329 = vunpack.c.l.b16 %v277
        %v330 = vunpack.c.l.b16 %v278
        %v331 = vunpack.c.h.b16 %v278
        %v332 = vunpack.c.l.b16 %v279
        %v333 = vunpack.c.l.b16 %v280
        %v334 = vunpack.c.h.b16 %v280
        %v335 = vunpack.c.l.b16 %v281
        %v336 = vunpack.c.l.b16 %v282
        %v337 = vunpack.c.h.b16 %v282
        %v338 = vunpack.c.l.b16 %v283
        %v339 = vunpack.c.l.b16 %v284
        %v340 = vunpack.c.h.b16 %v284
        %v341 = vunpack.c.l.b16 %v285
        %v342 = vunpack.c.l.b16 %v286
        %v343 = vunpack.c.h.b16 %v286
        %v344 = vunpack.c.l.b16 %v287
        %v345 = vpack.c.b16 %v324, %v321
        %v346 = vpack.c.b16 %v325, %v322
        %v347 = vpack.c.b16 %v326, %v323
        %v348 = vpack.c.b16 %v330, %v327
        %v349 = vpack.c.b16 %v331, %v328
        %v350 = vpack.c.b16 %v332, %v329
        %v351 = vpack.c.b16 %v336, %v333
        %v352 = vpack.c.b16 %v337, %v334
        %v353 = vpack.c.b16 %v338, %v335
        %v354 = vpack.c.b16 %v342, %v339
        %v355 = vpack.c.b16 %v343, %v340
        %v356 = vpack.c.b16 %v344, %v341
        %vm369 = vcmask 523264
        %v371 = vsel %vm369, %v256, 0
        %v374 = vsel %vm369, %v257, 0
        %v377 = vsel %vm369, %v258, 0
        %v380 = vsel %vm369, %v259, 0
        %v383 = vsel %vm369, %v260, 0
        %v386 = vsel %vm369, %v261, 0
        %v389 = vsel %vm369, %v262, 0
        %v392 = vsel %vm369, %v263, 0
        %v395 = vsel %vm369, %v264, 0
        %v398 = vsel %vm369, %v265, 0
        %v401 = vsel %vm369, %v266, 0
        %v404 = vsel %vm369, %v267, 0
        %v407 = vsel %vm369, %v268, 0
        %v410 = vsel %vm369, %v269, 0
        %v413 = vsel %vm369, %v270, 0
        %v416 = vsel %vm369, %v271, 0
        %418 = vmatprep.subr.bf16.mxu0 0
        %419 = vmatpush1.bf16.msra.mxu0 0
        %420 = vmatprep.subr.bf16.mxu0 0
        %421 = vmatpush1.bf16.msra.mxu0 0
        %422 = vmatprep.subr.bf16.mxu0 0
        %423 = vmatpush1.bf16.msra.mxu0 0
        %424 = vmatprep.subr.bf16.mxu0 0
        %425 = vmatpush1.bf16.msra.mxu0 0
        %426 = vmatprep.subr.bf16.mxu0 %v355
        %427 = vmatpush1.bf16.msra.mxu0 %v354
        %428 = vmatprep.subr.bf16.mxu0 %v352
        %429 = vmatpush1.bf16.msra.mxu0 %v351
        %430 = vmatprep.subr.bf16.mxu0 %v349
        %431 = vmatpush1.bf16.msra.mxu0 %v348
        %432 = vmatprep.subr.bf16.mxu0 %v346
        %433 = vmatpush1.bf16.msra.mxu0 %v345
        %434 = vmatprep.subr.bf16.mxu0 0
        %435 = vmatpush2.bf16.msra.mxu0 0
        %436 = vmatprep.subr.bf16.mxu0 0
        %437 = vmatpush2.bf16.msra.mxu0 0
        %438 = vmatprep.subr.bf16.mxu0 0
        %439 = vmatpush2.bf16.msra.mxu0 0
        %440 = vmatprep.subr.bf16.mxu0 0
        %441 = vmatpush2.bf16.msra.mxu0 0
        %442 = vmatprep.subr.bf16.mxu0 0
        %443 = vmatpush2.bf16.msra.mxu0 0
        %444 = vmatprep.subr.bf16.mxu0 0
        %445 = vmatpush2.bf16.msra.mxu0 0
        %446 = vmatprep.subr.bf16.mxu0 0
        %447 = vmatpush2.bf16.msra.mxu0 0
        %448 = vmatprep.subr.bf16.mxu0 0
        %449 = vmatpush2.bf16.msra.mxu0 0
        %450 = vmatprep.mubr.bf16.mxu0 0
        %451 = vmatmul.mubr.bf16.gmra.mxu0 %v371
        %v452 = vpop.f32.mrf.mxu0
        %v453 = vadd.f32 %v293, %v452
        %v454 = vpop.f32.mrf.mxu0
        %v455 = vadd.f32 %v297, %v454
        %v456 = vpop.f32.mrf.mxu0
        %v457 = vadd.f32 %v293, %v456
        %v458 = vpop.f32.mrf.mxu0
        %v459 = vadd.f32 %v297, %v458
        %460 = vmatprep.mubr.bf16.mxu0 0
        %461 = vmatmul.mubr.bf16.gmra.mxu0 %v374
        %v462 = vpop.f32.mrf.mxu0
        %v463 = vadd.f32 %v293, %v462
        %v464 = vpop.f32.mrf.mxu0
        %v465 = vadd.f32 %v297, %v464
        %v466 = vpop.f32.mrf.mxu0
        %v467 = vadd.f32 %v293, %v466
        %v468 = vpop.f32.mrf.mxu0
        %v469 = vadd.f32 %v297, %v468
        %470 = vmatprep.mubr.bf16.mxu0 0
        %471 = vmatmul.mubr.bf16.gmra.mxu0 %v377
        %v472 = vpop.f32.mrf.mxu0
        %v473 = vadd.f32 %v293, %v472
        %v474 = vpop.f32.mrf.mxu0
        %v475 = vadd.f32 %v297, %v474
        %v476 = vpop.f32.mrf.mxu0
        %v477 = vadd.f32 %v293, %v476
        %v478 = vpop.f32.mrf.mxu0
        %v479 = vadd.f32 %v297, %v478
        %480 = vmatprep.mubr.bf16.mxu0 0
        %481 = vmatmul.mubr.bf16.gmra.mxu0 %v380
        %v482 = vpop.f32.mrf.mxu0
        %v483 = vadd.f32 %v293, %v482
        %v484 = vpop.f32.mrf.mxu0
        %v485 = vadd.f32 %v297, %v484
        %v486 = vpop.f32.mrf.mxu0
        %v487 = vadd.f32 %v293, %v486
        %v488 = vpop.f32.mrf.mxu0
        %v489 = vadd.f32 %v297, %v488
        %490 = vmatprep.mubr.bf16.mxu0 0
        %491 = vmatmul.mubr.bf16.gmra.mxu0 %v383
        %v492 = vpop.f32.mrf.mxu0
        %v493 = vadd.f32 %v293, %v492
        %v494 = vpop.f32.mrf.mxu0
        %v495 = vadd.f32 %v297, %v494
        %v496 = vpop.f32.mrf.mxu0
        %v497 = vadd.f32 %v293, %v496
        %v498 = vpop.f32.mrf.mxu0
        %v499 = vadd.f32 %v297, %v498
        %500 = vmatprep.mubr.bf16.mxu0 0
        %501 = vmatmul.mubr.bf16.gmra.mxu0 %v386
        %v502 = vpop.f32.mrf.mxu0
        %v503 = vadd.f32 %v293, %v502
        %v504 = vpop.f32.mrf.mxu0
        %v505 = vadd.f32 %v297, %v504
        %v506 = vpop.f32.mrf.mxu0
        %v507 = vadd.f32 %v293, %v506
        %v508 = vpop.f32.mrf.mxu0
        %v509 = vadd.f32 %v297, %v508
        %510 = vmatprep.mubr.bf16.mxu0 0
        %511 = vmatmul.mubr.bf16.gmra.mxu0 %v389
        %v512 = vpop.f32.mrf.mxu0
        %v513 = vadd.f32 %v293, %v512
        %v514 = vpop.f32.mrf.mxu0
        %v515 = vadd.f32 %v297, %v514
        %v516 = vpop.f32.mrf.mxu0
        %v517 = vadd.f32 %v293, %v516
        %v518 = vpop.f32.mrf.mxu0
        %v519 = vadd.f32 %v297, %v518
        %520 = vmatprep.mubr.bf16.mxu0 0
        %521 = vmatmul.mubr.bf16.gmra.mxu0 %v392
        %v522 = vpop.f32.mrf.mxu0
        %v523 = vadd.f32 %v293, %v522
        %v524 = vpop.f32.mrf.mxu0
        %v525 = vadd.f32 %v297, %v524
        %v526 = vpop.f32.mrf.mxu0
        %v527 = vadd.f32 %v293, %v526
        %v528 = vpop.f32.mrf.mxu0
        %v529 = vadd.f32 %v297, %v528
        %530 = vmatprep.mubr.bf16.mxu0 0
        %531 = vmatmul.mubr.bf16.gmra.mxu0 %v395
        %v532 = vpop.f32.mrf.mxu0
        %v533 = vadd.f32 %v293, %v532
        %v534 = vpop.f32.mrf.mxu0
        %v535 = vadd.f32 %v297, %v534
        %v536 = vpop.f32.mrf.mxu0
        %v537 = vadd.f32 %v293, %v536
        %v538 = vpop.f32.mrf.mxu0
        %v539 = vadd.f32 %v297, %v538
        %540 = vmatprep.mubr.bf16.mxu0 0
        %541 = vmatmul.mubr.bf16.gmra.mxu0 %v398
        %v542 = vpop.f32.mrf.mxu0
        %v543 = vadd.f32 %v293, %v542
        %v544 = vpop.f32.mrf.mxu0
        %v545 = vadd.f32 %v297, %v544
        %v546 = vpop.f32.mrf.mxu0
        %v547 = vadd.f32 %v293, %v546
        %v548 = vpop.f32.mrf.mxu0
        %v549 = vadd.f32 %v297, %v548
        %550 = vmatprep.mubr.bf16.mxu0 0
        %551 = vmatmul.mubr.bf16.gmra.mxu0 %v401
        %v552 = vpop.f32.mrf.mxu0
        %v553 = vadd.f32 %v293, %v552
        %v554 = vpop.f32.mrf.mxu0
        %v555 = vadd.f32 %v297, %v554
        %v556 = vpop.f32.mrf.mxu0
        %v557 = vadd.f32 %v293, %v556
        %v558 = vpop.f32.mrf.mxu0
        %v559 = vadd.f32 %v297, %v558
        %560 = vmatprep.mubr.bf16.mxu0 0
        %561 = vmatmul.mubr.bf16.gmra.mxu0 %v404
        %v562 = vpop.f32.mrf.mxu0
        %v563 = vadd.f32 %v293, %v562
        %v564 = vpop.f32.mrf.mxu0
        %v565 = vadd.f32 %v297, %v564
        %v566 = vpop.f32.mrf.mxu0
        %v567 = vadd.f32 %v293, %v566
        %v568 = vpop.f32.mrf.mxu0
        %v569 = vadd.f32 %v297, %v568
        %570 = vmatprep.mubr.bf16.mxu0 0
        %571 = vmatmul.mubr.bf16.gmra.mxu0 %v407
        %v572 = vpop.f32.mrf.mxu0
        %v573 = vadd.f32 %v293, %v572
        %v574 = vpop.f32.mrf.mxu0
        %v575 = vadd.f32 %v297, %v574
        %v576 = vpop.f32.mrf.mxu0
        %v577 = vadd.f32 %v293, %v576
        %v578 = vpop.f32.mrf.mxu0
        %v579 = vadd.f32 %v297, %v578
        %580 = vmatprep.mubr.bf16.mxu0 0
        %581 = vmatmul.mubr.bf16.gmra.mxu0 %v410
        %v582 = vpop.f32.mrf.mxu0
        %v583 = vadd.f32 %v293, %v582
        %v584 = vpop.f32.mrf.mxu0
        %v585 = vadd.f32 %v297, %v584
        %v586 = vpop.f32.mrf.mxu0
        %v587 = vadd.f32 %v293, %v586
        %v588 = vpop.f32.mrf.mxu0
        %v589 = vadd.f32 %v297, %v588
        %590 = vmatprep.mubr.bf16.mxu0 0
        %591 = vmatmul.mubr.bf16.gmra.mxu0 %v413
        %v592 = vpop.f32.mrf.mxu0
        %v593 = vadd.f32 %v293, %v592
        %v594 = vpop.f32.mrf.mxu0
        %v595 = vadd.f32 %v297, %v594
        %v596 = vpop.f32.mrf.mxu0
        %v597 = vadd.f32 %v293, %v596
        %v598 = vpop.f32.mrf.mxu0
        %v599 = vadd.f32 %v297, %v598
        %600 = vmatprep.mubr.bf16.mxu0 0
        %601 = vmatmul.mubr.bf16.gmra.mxu0 %v416
        %v602 = vpop.f32.mrf.mxu0
        %v603 = vadd.f32 %v293, %v602
        %v604 = vpop.f32.mrf.mxu0
        %v605 = vadd.f32 %v297, %v604
        %v606 = vpop.f32.mrf.mxu0
        %v607 = vadd.f32 %v293, %v606
        %v608 = vpop.f32.mrf.mxu0
        %v609 = vadd.f32 %v297, %v608
        %610 = vdwg.mxu0
        %611 = vmatprep.subr.bf16.mxu0 0
        %612 = vmatpush1.bf16.msra.mxu0 0
        %613 = vmatprep.subr.bf16.mxu0 0
        %614 = vmatpush1.bf16.msra.mxu0 0
        %615 = vmatprep.subr.bf16.mxu0 0
        %616 = vmatpush1.bf16.msra.mxu0 0
        %617 = vmatprep.subr.bf16.mxu0 0
        %618 = vmatpush1.bf16.msra.mxu0 0
        %619 = vmatprep.subr.bf16.mxu0 0
        %620 = vmatpush1.bf16.msra.mxu0 %v356
        %621 = vmatprep.subr.bf16.mxu0 0
        %622 = vmatpush1.bf16.msra.mxu0 %v353
        %623 = vmatprep.subr.bf16.mxu0 0
        %624 = vmatpush1.bf16.msra.mxu0 %v350
        %625 = vmatprep.subr.bf16.mxu0 0
        %626 = vmatpush1.bf16.msra.mxu0 %v347
        %627 = vmatprep.subr.bf16.mxu0 0
        %628 = vmatpush2.bf16.msra.mxu0 0
        %629 = vmatprep.subr.bf16.mxu0 0
        %630 = vmatpush2.bf16.msra.mxu0 0
        %631 = vmatprep.subr.bf16.mxu0 0
        %632 = vmatpush2.bf16.msra.mxu0 0
        %633 = vmatprep.subr.bf16.mxu0 0
        %634 = vmatpush2.bf16.msra.mxu0 0
        %635 = vmatprep.subr.bf16.mxu0 0
        %636 = vmatpush2.bf16.msra.mxu0 0
        %637 = vmatprep.subr.bf16.mxu0 0
        %638 = vmatpush2.bf16.msra.mxu0 0
        %639 = vmatprep.subr.bf16.mxu0 0
        %640 = vmatpush2.bf16.msra.mxu0 0
        %641 = vmatprep.subr.bf16.mxu0 0
        %642 = vmatpush2.bf16.msra.mxu0 0
        %643 = vmatprep.mubr.bf16.mxu0 0
        %644 = vmatmul.mubr.bf16.gmra.mxu0 %v371
        %v645 = vpop.f32.mrf.mxu0
        %v646 = vadd.f32 %v301, %v645
        %v647 = vpop.f32.mrf.mxu0
        %v648 = vpop.f32.mrf.mxu0
        %v649 = vadd.f32 %v301, %v648
        %v650 = vpop.f32.mrf.mxu0
        %651 = vmatprep.mubr.bf16.mxu0 0
        %652 = vmatmul.mubr.bf16.gmra.mxu0 %v374
        %v653 = vpop.f32.mrf.mxu0
        %v654 = vadd.f32 %v301, %v653
        %v655 = vpop.f32.mrf.mxu0
        %v656 = vpop.f32.mrf.mxu0
        %v657 = vadd.f32 %v301, %v656
        %v658 = vpop.f32.mrf.mxu0
        %659 = vmatprep.mubr.bf16.mxu0 0
        %660 = vmatmul.mubr.bf16.gmra.mxu0 %v377
        %v661 = vpop.f32.mrf.mxu0
        %v662 = vadd.f32 %v301, %v661
        %v663 = vpop.f32.mrf.mxu0
        %v664 = vpop.f32.mrf.mxu0
        %v665 = vadd.f32 %v301, %v664
        %v666 = vpop.f32.mrf.mxu0
        %667 = vmatprep.mubr.bf16.mxu0 0
        %668 = vmatmul.mubr.bf16.gmra.mxu0 %v380
        %v669 = vpop.f32.mrf.mxu0
        %v670 = vadd.f32 %v301, %v669
        %v671 = vpop.f32.mrf.mxu0
        %v672 = vpop.f32.mrf.mxu0
        %v673 = vadd.f32 %v301, %v672
        %v674 = vpop.f32.mrf.mxu0
        %675 = vmatprep.mubr.bf16.mxu0 0
        %676 = vmatmul.mubr.bf16.gmra.mxu0 %v383
        %v677 = vpop.f32.mrf.mxu0
        %v678 = vadd.f32 %v301, %v677
        %v679 = vpop.f32.mrf.mxu0
        %v680 = vpop.f32.mrf.mxu0
        %v681 = vadd.f32 %v301, %v680
        %v682 = vpop.f32.mrf.mxu0
        %683 = vmatprep.mubr.bf16.mxu0 0
        %684 = vmatmul.mubr.bf16.gmra.mxu0 %v386
        %v685 = vpop.f32.mrf.mxu0
        %v686 = vadd.f32 %v301, %v685
        %v687 = vpop.f32.mrf.mxu0
        %v688 = vpop.f32.mrf.mxu0
        %v689 = vadd.f32 %v301, %v688
        %v690 = vpop.f32.mrf.mxu0
        %691 = vmatprep.mubr.bf16.mxu0 0
        %692 = vmatmul.mubr.bf16.gmra.mxu0 %v389
        %v693 = vpop.f32.mrf.mxu0
        %v694 = vadd.f32 %v301, %v693
        %v695 = vpop.f32.mrf.mxu0
        %v696 = vpop.f32.mrf.mxu0
        %v697 = vadd.f32 %v301, %v696
        %v698 = vpop.f32.mrf.mxu0
        %699 = vmatprep.mubr.bf16.mxu0 0
        %700 = vmatmul.mubr.bf16.gmra.mxu0 %v392
        %v701 = vpop.f32.mrf.mxu0
        %v702 = vadd.f32 %v301, %v701
        %v703 = vpop.f32.mrf.mxu0
        %v704 = vpop.f32.mrf.mxu0
        %v705 = vadd.f32 %v301, %v704
        %v706 = vpop.f32.mrf.mxu0
        %707 = vmatprep.mubr.bf16.mxu0 0
        %708 = vmatmul.mubr.bf16.gmra.mxu0 %v395
        %v709 = vpop.f32.mrf.mxu0
        %v710 = vadd.f32 %v301, %v709
        %v711 = vpop.f32.mrf.mxu0
        %v712 = vpop.f32.mrf.mxu0
        %v713 = vadd.f32 %v301, %v712
        %v714 = vpop.f32.mrf.mxu0
        %715 = vmatprep.mubr.bf16.mxu0 0
        %716 = vmatmul.mubr.bf16.gmra.mxu0 %v398
        %v717 = vpop.f32.mrf.mxu0
        %v718 = vadd.f32 %v301, %v717
        %v719 = vpop.f32.mrf.mxu0
        %v720 = vpop.f32.mrf.mxu0
        %v721 = vadd.f32 %v301, %v720
        %v722 = vpop.f32.mrf.mxu0
        %723 = vmatprep.mubr.bf16.mxu0 0
        %724 = vmatmul.mubr.bf16.gmra.mxu0 %v401
        %v725 = vpop.f32.mrf.mxu0
        %v726 = vadd.f32 %v301, %v725
        %v727 = vpop.f32.mrf.mxu0
        %v728 = vpop.f32.mrf.mxu0
        %v729 = vadd.f32 %v301, %v728
        %v730 = vpop.f32.mrf.mxu0
        %731 = vmatprep.mubr.bf16.mxu0 0
        %732 = vmatmul.mubr.bf16.gmra.mxu0 %v404
        %v733 = vpop.f32.mrf.mxu0
        %v734 = vadd.f32 %v301, %v733
        %v735 = vpop.f32.mrf.mxu0
        %v736 = vpop.f32.mrf.mxu0
        %v737 = vadd.f32 %v301, %v736
        %v738 = vpop.f32.mrf.mxu0
        %739 = vmatprep.mubr.bf16.mxu0 0
        %740 = vmatmul.mubr.bf16.gmra.mxu0 %v407
        %v741 = vpop.f32.mrf.mxu0
        %v742 = vadd.f32 %v301, %v741
        %v743 = vpop.f32.mrf.mxu0
        %v744 = vpop.f32.mrf.mxu0
        %v745 = vadd.f32 %v301, %v744
        %v746 = vpop.f32.mrf.mxu0
        %747 = vmatprep.mubr.bf16.mxu0 0
        %748 = vmatmul.mubr.bf16.gmra.mxu0 %v410
        %v749 = vpop.f32.mrf.mxu0
        %v750 = vadd.f32 %v301, %v749
        %v751 = vpop.f32.mrf.mxu0
        %v752 = vpop.f32.mrf.mxu0
        %v753 = vadd.f32 %v301, %v752
        %v754 = vpop.f32.mrf.mxu0
        %755 = vmatprep.mubr.bf16.mxu0 0
        %756 = vmatmul.mubr.bf16.gmra.mxu0 %v413
        %v757 = vpop.f32.mrf.mxu0
        %v758 = vadd.f32 %v301, %v757
        %v759 = vpop.f32.mrf.mxu0
        %v760 = vpop.f32.mrf.mxu0
        %v761 = vadd.f32 %v301, %v760
        %v762 = vpop.f32.mrf.mxu0
        %763 = vmatprep.mubr.bf16.mxu0 0
        %764 = vmatmul.mubr.bf16.gmra.mxu0 %v416
        %v765 = vpop.f32.mrf.mxu0
        %v766 = vadd.f32 %v301, %v765
        %v767 = vpop.f32.mrf.mxu0
        %v768 = vpop.f32.mrf.mxu0
        %v769 = vadd.f32 %v301, %v768
        %v770 = vpop.f32.mrf.mxu0
        %771 = vdwg.mxu0
        %v772 = vpack.c.bf16 %v459, %v455
        %v773 = vpack.c.bf16 %v469, %v465
        %v774 = vpack.c.bf16 %v479, %v475
        %v775 = vpack.c.bf16 %v489, %v485
        %v776 = vpack.c.bf16 %v499, %v495
        %v777 = vpack.c.bf16 %v509, %v505
        %v778 = vpack.c.bf16 %v519, %v515
        %v779 = vpack.c.bf16 %v529, %v525
        %v780 = vpack.c.bf16 %v539, %v535
        %v781 = vpack.c.bf16 %v549, %v545
        %v782 = vpack.c.bf16 %v559, %v555
        %v783 = vpack.c.bf16 %v569, %v565
        %v784 = vpack.c.bf16 %v579, %v575
        %v785 = vpack.c.bf16 %v589, %v585
        %v786 = vpack.c.bf16 %v599, %v595
        %v787 = vpack.c.bf16 %v609, %v605
        %v788 = vpack.c.bf16 %v649, %v646
        %v789 = vpack.c.bf16 %v657, %v654
        %v790 = vpack.c.bf16 %v665, %v662
        %v791 = vpack.c.bf16 %v673, %v670
        %v792 = vpack.c.bf16 %v681, %v678
        %v793 = vpack.c.bf16 %v689, %v686
        %v794 = vpack.c.bf16 %v697, %v694
        %v795 = vpack.c.bf16 %v705, %v702
        %v796 = vpack.c.bf16 %v713, %v710
        %v797 = vpack.c.bf16 %v721, %v718
        %v798 = vpack.c.bf16 %v729, %v726
        %v799 = vpack.c.bf16 %v737, %v734
        %v800 = vpack.c.bf16 %v745, %v742
        %v801 = vpack.c.bf16 %v753, %v750
        %v802 = vpack.c.bf16 %v761, %v758
        %v803 = vpack.c.bf16 %v769, %v766
        %804 = vst [vmem:[#allocation2] sm:$0xff] %v453
        %805 = vst [vmem:[#allocation2 + $0x8] sm:$0xff] %v457
        %806 = vst [vmem:[#allocation2 + $0x10] sm:$0xff] %v463
        %807 = vst [vmem:[#allocation2 + $0x18] sm:$0xff] %v467
        %808 = vst [vmem:[#allocation2 + $0x20] sm:$0xff] %v473
        %809 = vst [vmem:[#allocation2 + $0x28] sm:$0xff] %v477
        %810 = vst [vmem:[#allocation2 + $0x30] sm:$0xff] %v483
        %811 = vst [vmem:[#allocation2 + $0x38] sm:$0xff] %v487
        %812 = vst [vmem:[#allocation2 + $0x40] sm:$0xff] %v493
        %813 = vst [vmem:[#allocation2 + $0x48] sm:$0xff] %v497
        %814 = vst [vmem:[#allocation2 + $0x50] sm:$0xff] %v503
        %815 = vst [vmem:[#allocation2 + $0x58] sm:$0xff] %v507
        %816 = vst [vmem:[#allocation2 + $0x60] sm:$0xff] %v513
        %817 = vst [vmem:[#allocation2 + $0x68] sm:$0xff] %v517
        %818 = vst [vmem:[#allocation2 + $0x70] sm:$0xff] %v523
        %819 = vst [vmem:[#allocation2 + $0x78] sm:$0xff] %v527
        %820 = vst [vmem:[#allocation2 + $0x80] sm:$0xff] %v533
        %821 = vst [vmem:[#allocation2 + $0x88] sm:$0xff] %v537
        %822 = vst [vmem:[#allocation2 + $0x90] sm:$0xff] %v543
        %823 = vst [vmem:[#allocation2 + $0x98] sm:$0xff] %v547
        %824 = vst [vmem:[#allocation2 + $0xa0] sm:$0xff] %v553
        %825 = vst [vmem:[#allocation2 + $0xa8] sm:$0xff] %v557
        %826 = vst [vmem:[#allocation2 + $0xb0] sm:$0xff] %v563
        %827 = vst [vmem:[#allocation2 + $0xb8] sm:$0xff] %v567
        %828 = vst [vmem:[#allocation2 + $0xc0] sm:$0xff] %v573
        %829 = vst [vmem:[#allocation2 + $0xc8] sm:$0xff] %v577
        %830 = vst [vmem:[#allocation2 + $0xd0] sm:$0xff] %v583
        %831 = vst [vmem:[#allocation2 + $0xd8] sm:$0xff] %v587
        %832 = vst [vmem:[#allocation2 + $0xe0] sm:$0xff] %v593
        %833 = vst [vmem:[#allocation2 + $0xe8] sm:$0xff] %v597
        %834 = vst [vmem:[#allocation2 + $0xf0] sm:$0xff] %v603
        %835 = vst [vmem:[#allocation2 + $0xf8] sm:$0xff] %v607
        %v836 = vld [vmem:[#allocation2] ss:$2 sm:$0xff]
        %s837 = scalar_lea.vmem [#allocation2], 16
        %v838 = vld [vmem:[%s837] ss:$2 sm:$0xff]
        %s839 = scalar_lea.vmem [#allocation2], 32
        %v840 = vld [vmem:[%s839] ss:$2 sm:$0xff]
        %s841 = scalar_lea.vmem [#allocation2], 48
        %v842 = vld [vmem:[%s841] ss:$2 sm:$0xff]
        %s843 = scalar_lea.vmem [#allocation2], 64
        %v844 = vld [vmem:[%s843] ss:$2 sm:$0xff]
        %s845 = scalar_lea.vmem [#allocation2], 80
        %v846 = vld [vmem:[%s845] ss:$2 sm:$0xff]
        %s847 = scalar_lea.vmem [#allocation2], 96
        %v848 = vld [vmem:[%s847] ss:$2 sm:$0xff]
        %s849 = scalar_lea.vmem [#allocation2], 112
        %v850 = vld [vmem:[%s849] ss:$2 sm:$0xff]
        %s851 = scalar_lea.vmem [#allocation2], 128
        %v852 = vld [vmem:[%s851] ss:$2 sm:$0xff]
        %s853 = scalar_lea.vmem [#allocation2], 144
        %v854 = vld [vmem:[%s853] ss:$2 sm:$0xff]
        %s855 = scalar_lea.vmem [#allocation2], 160
        %v856 = vld [vmem:[%s855] ss:$2 sm:$0xff]
        %s857 = scalar_lea.vmem [#allocation2], 176
        %v858 = vld [vmem:[%s857] ss:$2 sm:$0xff]
        %s859 = scalar_lea.vmem [#allocation2], 192
        %v860 = vld [vmem:[%s859] ss:$2 sm:$0xff]
        %s861 = scalar_lea.vmem [#allocation2], 208
        %v862 = vld [vmem:[%s861] ss:$2 sm:$0xff]
        %s863 = scalar_lea.vmem [#allocation2], 224
        %v864 = vld [vmem:[%s863] ss:$2 sm:$0xff]
        %s865 = scalar_lea.vmem [#allocation2], 240
        %v866 = vld [vmem:[%s865] ss:$2 sm:$0xff]
        %s867 = scalar_lea.vmem [#allocation2], 1
        %v868 = vld [vmem:[%s867] ss:$2 sm:$0xff]
        %s869 = scalar_lea.vmem [#allocation2], 17
        %v870 = vld [vmem:[%s869] ss:$2 sm:$0xff]
        %s871 = scalar_lea.vmem [#allocation2], 33
        %v872 = vld [vmem:[%s871] ss:$2 sm:$0xff]
        %s873 = scalar_lea.vmem [#allocation2], 49
        %v874 = vld [vmem:[%s873] ss:$2 sm:$0xff]
        %s875 = scalar_lea.vmem [#allocation2], 65
        %v876 = vld [vmem:[%s875] ss:$2 sm:$0xff]
        %s877 = scalar_lea.vmem [#allocation2], 81
        %v878 = vld [vmem:[%s877] ss:$2 sm:$0xff]
        %s879 = scalar_lea.vmem [#allocation2], 97
        %v880 = vld [vmem:[%s879] ss:$2 sm:$0xff]
        %s881 = scalar_lea.vmem [#allocation2], 113
        %v882 = vld [vmem:[%s881] ss:$2 sm:$0xff]
        %s883 = scalar_lea.vmem [#allocation2], 129
        %v884 = vld [vmem:[%s883] ss:$2 sm:$0xff]
        %s885 = scalar_lea.vmem [#allocation2], 145
        %v886 = vld [vmem:[%s885] ss:$2 sm:$0xff]
        %s887 = scalar_lea.vmem [#allocation2], 161
        %v888 = vld [vmem:[%s887] ss:$2 sm:$0xff]
        %s889 = scalar_lea.vmem [#allocation2], 177
        %v890 = vld [vmem:[%s889] ss:$2 sm:$0xff]
        %s891 = scalar_lea.vmem [#allocation2], 193
        %v892 = vld [vmem:[%s891] ss:$2 sm:$0xff]
        %s893 = scalar_lea.vmem [#allocation2], 209
        %v894 = vld [vmem:[%s893] ss:$2 sm:$0xff]
        %s895 = scalar_lea.vmem [#allocation2], 225
        %v896 = vld [vmem:[%s895] ss:$2 sm:$0xff]
        %s897 = scalar_lea.vmem [#allocation2], 241
        %v898 = vld [vmem:[%s897] ss:$2 sm:$0xff]
        %v899 = vmax.f32 %v836, %v868
        %v900 = vmax.f32 %v838, %v870
        %v901 = vmax.f32 %v840, %v872
        %v902 = vmax.f32 %v842, %v874
        %v903 = vmax.f32 %v844, %v876
        %v904 = vmax.f32 %v846, %v878
        %v905 = vmax.f32 %v848, %v880
        %v906 = vmax.f32 %v850, %v882
        %v907 = vmax.f32 %v852, %v884
        %v908 = vmax.f32 %v854, %v886
        %v909 = vmax.f32 %v856, %v888
        %v910 = vmax.f32 %v858, %v890
        %v911 = vmax.f32 %v860, %v892
        %v912 = vmax.f32 %v862, %v894
        %v913 = vmax.f32 %v864, %v896
        %v914 = vmax.f32 %v866, %v898
        %v915 = vmax.f32 %v899, %v900
        %v916 = vmax.f32 %v901, %v902
        %v917 = vmax.f32 %v903, %v904
        %v918 = vmax.f32 %v905, %v906
        %v919 = vmax.f32 %v907, %v908
        %v920 = vmax.f32 %v909, %v910
        %v921 = vmax.f32 %v911, %v912
        %v922 = vmax.f32 %v913, %v914
        %v923 = vpack.c.bf16 %v916, %v915
        %v924 = vpack.c.bf16 %v918, %v917
        %v925 = vpack.c.bf16 %v920, %v919
        %v926 = vpack.c.bf16 %v922, %v921
        %v927 = vld [vmem:[%s3] sm:$0xf]
        %v928 = vld [vmem:[%s3 + $0x4] sm:$0xf]
        %v929 = vld [vmem:[%s3 + $0x8] sm:$0xf]
        %v930 = vld [vmem:[%s3 + $0xc] sm:$0xf]
        %v931 = vld [vmem:[%s3 + $0x10] sm:$0xf]
        %v932 = vld [vmem:[%s3 + $0x14] sm:$0xf]
        %v933 = vld [vmem:[%s3 + $0x18] sm:$0xf]
        %v934 = vld [vmem:[%s3 + $0x1c] sm:$0xf]
        %v935 = vld [vmem:[%s3 + $0x20] sm:$0xf]
        %v936 = vld [vmem:[%s3 + $0x24] sm:$0xf]
        %v937 = vld [vmem:[%s3 + $0x28] sm:$0xf]
        %v938 = vld [vmem:[%s3 + $0x2c] sm:$0xf]
        %v939 = vld [vmem:[%s3 + $0x30] sm:$0xf]
        %v940 = vld [vmem:[%s3 + $0x34] sm:$0xf]
        %v941 = vld [vmem:[%s3 + $0x38] sm:$0xf]
        %v942 = vld [vmem:[%s3 + $0x3c] sm:$0xf]
        %v944 = vsel %vm369, %v923, 0
        %v947 = vsel %vm369, %v924, 0
        %v950 = vsel %vm369, %v925, 0
        %v953 = vsel %vm369, %v926, 0
        %v956 = vsel %vm369, %v772, 0
        %v959 = vsel %vm369, %v773, 0
        %v962 = vsel %vm369, %v774, 0
        %v965 = vsel %vm369, %v775, 0
        %v968 = vsel %vm369, %v776, 0
        %v971 = vsel %vm369, %v777, 0
        %v974 = vsel %vm369, %v778, 0
        %v977 = vsel %vm369, %v779, 0
        %v980 = vsel %vm369, %v780, 0
        %v983 = vsel %vm369, %v781, 0
        %v986 = vsel %vm369, %v782, 0
        %v989 = vsel %vm369, %v783, 0
        %v992 = vsel %vm369, %v784, 0
        %v995 = vsel %vm369, %v785, 0
        %v998 = vsel %vm369, %v786, 0
        %v1001 = vsel %vm369, %v787, 0
        %1003 = vmatprep.subr.bf16.mxu0 0
        %1004 = vmatpush1.bf16.xpose.msra.mxu0 %v977
        %1005 = vmatprep.subr.bf16.mxu0 0
        %1006 = vmatpush1.bf16.xpose.msra.mxu0 %v974
        %1007 = vmatprep.subr.bf16.mxu0 0
        %1008 = vmatpush1.bf16.xpose.msra.mxu0 %v971
        %1009 = vmatprep.subr.bf16.mxu0 0
        %1010 = vmatpush1.bf16.xpose.msra.mxu0 %v968
        %1011 = vmatprep.subr.bf16.mxu0 0
        %1012 = vmatpush1.bf16.xpose.msra.mxu0 %v965
        %1013 = vmatprep.subr.bf16.mxu0 0
        %1014 = vmatpush1.bf16.xpose.msra.mxu0 %v962
        %1015 = vmatprep.subr.bf16.mxu0 0
        %1016 = vmatpush1.bf16.xpose.msra.mxu0 %v959
        %1017 = vmatprep.subr.bf16.mxu0 0
        %1018 = vmatpush1.bf16.xpose.msra.mxu0 %v956
        %1019 = vmatprep.subr.bf16.mxu0 0
        %1020 = vmatpush2.bf16.xpose.msra.mxu0 %v1001
        %1021 = vmatprep.subr.bf16.mxu0 0
        %1022 = vmatpush2.bf16.xpose.msra.mxu0 %v998
        %1023 = vmatprep.subr.bf16.mxu0 0
        %1024 = vmatpush2.bf16.xpose.msra.mxu0 %v995
        %1025 = vmatprep.subr.bf16.mxu0 0
        %1026 = vmatpush2.bf16.xpose.msra.mxu0 %v992
        %1027 = vmatprep.subr.bf16.mxu0 0
        %1028 = vmatpush2.bf16.xpose.msra.mxu0 %v989
        %1029 = vmatprep.subr.bf16.mxu0 0
        %1030 = vmatpush2.bf16.xpose.msra.mxu0 %v986
        %1031 = vmatprep.subr.bf16.mxu0 0
        %1032 = vmatpush2.bf16.xpose.msra.mxu0 %v983
        %1033 = vmatprep.subr.bf16.mxu0 0
        %1034 = vmatpush2.bf16.xpose.msra.mxu0 %v980
        %1035 = vmatprep.mubr.bf16.mxu0 0
        %1036 = vmatmul.mubr.bf16.gmra.mxu0 %v944
        %v1037 = vpop.f32.mrf.mxu0
        %v1038 = vadd.f32 0.0, %v1037
        %v1039 = vpop.f32.mrf.mxu0
        %v1040 = vadd.f32 0.0, %v1039
        %v1041 = vpop.f32.mrf.mxu0
        %v1042 = vadd.f32 0.0, %v1041
        %v1043 = vpop.f32.mrf.mxu0
        %v1044 = vadd.f32 0.0, %v1043
        %1045 = vmatprep.mubr.bf16.mxu0 0
        %1046 = vmatmul.mubr.bf16.gmra.mxu0 %v947
        %v1047 = vpop.f32.mrf.mxu0
        %v1048 = vadd.f32 0.0, %v1047
        %v1049 = vpop.f32.mrf.mxu0
        %v1050 = vadd.f32 0.0, %v1049
        %v1051 = vpop.f32.mrf.mxu0
        %v1052 = vadd.f32 0.0, %v1051
        %v1053 = vpop.f32.mrf.mxu0
        %v1054 = vadd.f32 0.0, %v1053
        %1055 = vmatprep.mubr.bf16.mxu0 0
        %1056 = vmatmul.mubr.bf16.gmra.mxu0 %v950
        %v1057 = vpop.f32.mrf.mxu0
        %v1058 = vadd.f32 0.0, %v1057
        %v1059 = vpop.f32.mrf.mxu0
        %v1060 = vadd.f32 0.0, %v1059
        %v1061 = vpop.f32.mrf.mxu0
        %v1062 = vadd.f32 0.0, %v1061
        %v1063 = vpop.f32.mrf.mxu0
        %v1064 = vadd.f32 0.0, %v1063
        %1065 = vmatprep.mubr.bf16.mxu0 0
        %1066 = vmatmul.mubr.bf16.gmra.mxu0 %v953
        %v1067 = vpop.f32.mrf.mxu0
        %v1068 = vadd.f32 0.0, %v1067
        %v1069 = vpop.f32.mrf.mxu0
        %v1070 = vadd.f32 0.0, %v1069
        %v1071 = vpop.f32.mrf.mxu0
        %v1072 = vadd.f32 0.0, %v1071
        %v1073 = vpop.f32.mrf.mxu0
        %v1074 = vadd.f32 0.0, %v1073
        %1075 = vdwg.mxu0
        %v1076 = vmax.f32 %v1038, %v1040
        %1077 = vmax.xlane.f32.xlu0 %v1076
        %v1078 = vpop.xlane.xlu0 %1077
        %v1079 = vmax.f32 %v1042, %v1044
        %1080 = vmax.xlane.f32.xlu0 %v1079
        %v1081 = vpop.xlane.xlu0 %1080
        %v1082 = vmax.f32 %v1048, %v1050
        %1083 = vmax.xlane.f32.xlu0 %v1082
        %v1084 = vpop.xlane.xlu0 %1083
        %v1085 = vmax.f32 %v1052, %v1054
        %1086 = vmax.xlane.f32.xlu0 %v1085
        %v1087 = vpop.xlane.xlu0 %1086
        %v1088 = vmax.f32 %v1058, %v1060
        %1089 = vmax.xlane.f32.xlu0 %v1088
        %v1090 = vpop.xlane.xlu0 %1089
        %v1091 = vmax.f32 %v1062, %v1064
        %1092 = vmax.xlane.f32.xlu0 %v1091
        %v1093 = vpop.xlane.xlu0 %1092
        %v1094 = vmax.f32 %v1068, %v1070
        %1095 = vmax.xlane.f32.xlu0 %v1094
        %v1096 = vpop.xlane.xlu0 %1095
        %v1097 = vmax.f32 %v1072, %v1074
        %1098 = vmax.xlane.f32.xlu0 %v1097
        %v1099 = vpop.xlane.xlu0 %1098
        %v1100 = vsub.f32 %v1038, %v1078
        %v1101 = vsub.f32 %v1040, %v1078
        %v1102 = vsub.f32 %v1042, %v1081
        %v1103 = vsub.f32 %v1044, %v1081
        %v1104 = vsub.f32 %v1048, %v1084
        %v1105 = vsub.f32 %v1050, %v1084
        %v1106 = vsub.f32 %v1052, %v1087
        %v1107 = vsub.f32 %v1054, %v1087
        %v1108 = vsub.f32 %v1058, %v1090
        %v1109 = vsub.f32 %v1060, %v1090
        %v1110 = vsub.f32 %v1062, %v1093
        %v1111 = vsub.f32 %v1064, %v1093
        %v1112 = vsub.f32 %v1068, %v1096
        %v1113 = vsub.f32 %v1070, %v1096
        %v1114 = vsub.f32 %v1072, %v1099
        %v1115 = vsub.f32 %v1074, %v1099
        %v1116 = vmul.f32 %v1100, 1.442695
        %v1117 = vpow.pop %v1116
        %v1118 = vmul.f32 %v1101, 1.442695
        %v1119 = vpow.pop %v1118
        %v1120 = vmul.f32 %v1102, 1.442695
        %v1121 = vpow.pop %v1120
        %v1122 = vmul.f32 %v1103, 1.442695
        %v1123 = vpow.pop %v1122
        %v1124 = vmul.f32 %v1104, 1.442695
        %v1125 = vpow.pop %v1124
        %v1126 = vmul.f32 %v1105, 1.442695
        %v1127 = vpow.pop %v1126
        %v1128 = vmul.f32 %v1106, 1.442695
        %v1129 = vpow.pop %v1128
        %v1130 = vmul.f32 %v1107, 1.442695
        %v1131 = vpow.pop %v1130
        %v1132 = vmul.f32 %v1108, 1.442695
        %v1133 = vpow.pop %v1132
        %v1134 = vmul.f32 %v1109, 1.442695
        %v1135 = vpow.pop %v1134
        %v1136 = vmul.f32 %v1110, 1.442695
        %v1137 = vpow.pop %v1136
        %v1138 = vmul.f32 %v1111, 1.442695
        %v1139 = vpow.pop %v1138
        %v1140 = vmul.f32 %v1112, 1.442695
        %v1141 = vpow.pop %v1140
        %v1142 = vmul.f32 %v1113, 1.442695
        %v1143 = vpow.pop %v1142
        %v1144 = vmul.f32 %v1114, 1.442695
        %v1145 = vpow.pop %v1144
        %v1146 = vmul.f32 %v1115, 1.442695
        %v1147 = vpow.pop %v1146
        %v1148 = vadd.f32 %v1117, %v1119
        %1149 = vadd.xlane.f32.xlu0 %v1148
        %v1150 = vpop.xlane.xlu0 %1149
        %v1151 = vadd.f32 %v1121, %v1123
        %1152 = vadd.xlane.f32.xlu0 %v1151
        %v1153 = vpop.xlane.xlu0 %1152
        %v1154 = vadd.f32 %v1125, %v1127
        %1155 = vadd.xlane.f32.xlu0 %v1154
        %v1156 = vpop.xlane.xlu0 %1155
        %v1157 = vadd.f32 %v1129, %v1131
        %1158 = vadd.xlane.f32.xlu0 %v1157
        %v1159 = vpop.xlane.xlu0 %1158
        %v1160 = vadd.f32 %v1133, %v1135
        %1161 = vadd.xlane.f32.xlu0 %v1160
        %v1162 = vpop.xlane.xlu0 %1161
        %v1163 = vadd.f32 %v1137, %v1139
        %1164 = vadd.xlane.f32.xlu0 %v1163
        %v1165 = vpop.xlane.xlu0 %1164
        %v1166 = vadd.f32 %v1141, %v1143
        %1167 = vadd.xlane.f32.xlu0 %v1166
        %v1168 = vpop.xlane.xlu0 %1167
        %v1169 = vadd.f32 %v1145, %v1147
        %1170 = vadd.xlane.f32.xlu0 %v1169
        %v1171 = vpop.xlane.xlu0 %1170
        %v1172 = vrcp.pop %v1150
        %v1173 = vrcp.pop %v1153
        %v1174 = vrcp.pop %v1156
        %v1175 = vrcp.pop %v1159
        %v1176 = vrcp.pop %v1162
        %v1177 = vrcp.pop %v1165
        %v1178 = vrcp.pop %v1168
        %v1179 = vrcp.pop %v1171
        %v1180 = vmul.f32 %v1117, %v1172
        %v1181 = vmul.f32 %v1119, %v1172
        %v1182 = vmul.f32 %v1121, %v1173
        %v1183 = vmul.f32 %v1123, %v1173
        %v1184 = vmul.f32 %v1125, %v1174
        %v1185 = vmul.f32 %v1127, %v1174
        %v1186 = vmul.f32 %v1129, %v1175
        %v1187 = vmul.f32 %v1131, %v1175
        %v1188 = vmul.f32 %v1133, %v1176
        %v1189 = vmul.f32 %v1135, %v1176
        %v1190 = vmul.f32 %v1137, %v1177
        %v1191 = vmul.f32 %v1139, %v1177
        %v1192 = vmul.f32 %v1141, %v1178
        %v1193 = vmul.f32 %v1143, %v1178
        %v1194 = vmul.f32 %v1145, %v1179
        %v1195 = vmul.f32 %v1147, %v1179
        %v1196 = vpack.c.bf16 %v1182, %v1180
        %v1197 = vpack.c.bf16 %v1183, %v1181
        %v1198 = vpack.c.bf16 %v1186, %v1184
        %v1199 = vpack.c.bf16 %v1187, %v1185
        %v1200 = vpack.c.bf16 %v1190, %v1188
        %v1201 = vpack.c.bf16 %v1191, %v1189
        %v1202 = vpack.c.bf16 %v1194, %v1192
        %v1203 = vpack.c.bf16 %v1195, %v1193
        %1204 = vmatprep.subr.bf16.mxu0 0
        %1205 = vmatpush1.bf16.msra.mxu0 %v795
        %1206 = vmatprep.subr.bf16.mxu0 0
        %1207 = vmatpush1.bf16.msra.mxu0 %v794
        %1208 = vmatprep.subr.bf16.mxu0 0
        %1209 = vmatpush1.bf16.msra.mxu0 %v793
        %1210 = vmatprep.subr.bf16.mxu0 0
        %1211 = vmatpush1.bf16.msra.mxu0 %v792
        %1212 = vmatprep.subr.bf16.mxu0 0
        %1213 = vmatpush1.bf16.msra.mxu0 %v791
        %1214 = vmatprep.subr.bf16.mxu0 0
        %1215 = vmatpush1.bf16.msra.mxu0 %v790
        %1216 = vmatprep.subr.bf16.mxu0 0
        %1217 = vmatpush1.bf16.msra.mxu0 %v789
        %1218 = vmatprep.subr.bf16.mxu0 0
        %1219 = vmatpush1.bf16.msra.mxu0 %v788
        %1220 = vmatprep.subr.bf16.mxu0 0
        %1221 = vmatpush2.bf16.msra.mxu0 %v803
        %1222 = vmatprep.subr.bf16.mxu0 0
        %1223 = vmatpush2.bf16.msra.mxu0 %v802
        %1224 = vmatprep.subr.bf16.mxu0 0
        %1225 = vmatpush2.bf16.msra.mxu0 %v801
        %1226 = vmatprep.subr.bf16.mxu0 0
        %1227 = vmatpush2.bf16.msra.mxu0 %v800
        %1228 = vmatprep.subr.bf16.mxu0 0
        %1229 = vmatpush2.bf16.msra.mxu0 %v799
        %1230 = vmatprep.subr.bf16.mxu0 0
        %1231 = vmatpush2.bf16.msra.mxu0 %v798
        %1232 = vmatprep.subr.bf16.mxu0 0
        %1233 = vmatpush2.bf16.msra.mxu0 %v797
        %1234 = vmatprep.subr.bf16.mxu0 0
        %1235 = vmatpush2.bf16.msra.mxu0 %v796
        %1236 = vmatprep.mubr.bf16.mxu0 %v1197
        %1237 = vmatmul.mubr.bf16.gmra.mxu0 %v1196
        %v1238 = vpop.f32.mrf.mxu0
        %v1239 = vadd.f32 0.0, %v1238
        %v1240 = vpop.f32.mrf.mxu0
        %v1241 = vpop.f32.mrf.mxu0
        %v1242 = vadd.f32 0.0, %v1241
        %v1243 = vpop.f32.mrf.mxu0
        %1244 = vmatprep.mubr.bf16.mxu0 %v1199
        %1245 = vmatmul.mubr.bf16.gmra.mxu0 %v1198
        %v1246 = vpop.f32.mrf.mxu0
        %v1247 = vadd.f32 0.0, %v1246
        %v1248 = vpop.f32.mrf.mxu0
        %v1249 = vpop.f32.mrf.mxu0
        %v1250 = vadd.f32 0.0, %v1249
        %v1251 = vpop.f32.mrf.mxu0
        %1252 = vmatprep.mubr.bf16.mxu0 %v1201
        %1253 = vmatmul.mubr.bf16.gmra.mxu0 %v1200
        %v1254 = vpop.f32.mrf.mxu0
        %v1255 = vadd.f32 0.0, %v1254
        %v1256 = vpop.f32.mrf.mxu0
        %v1257 = vpop.f32.mrf.mxu0
        %v1258 = vadd.f32 0.0, %v1257
        %v1259 = vpop.f32.mrf.mxu0
        %1260 = vmatprep.mubr.bf16.mxu0 %v1203
        %1261 = vmatmul.mubr.bf16.gmra.mxu0 %v1202
        %v1262 = vpop.f32.mrf.mxu0
        %v1263 = vadd.f32 0.0, %v1262
        %v1264 = vpop.f32.mrf.mxu0
        %v1265 = vpop.f32.mrf.mxu0
        %v1266 = vadd.f32 0.0, %v1265
        %v1267 = vpop.f32.mrf.mxu0
        %1268 = vdwg.mxu0
        %v1269 = vpack.c.bf16 %v1242, %v1239
        %v1270 = vpack.c.bf16 %v1250, %v1247
        %v1271 = vpack.c.bf16 %v1258, %v1255
        %v1272 = vpack.c.bf16 %v1266, %v1263
        %1277 = vrot.lane.b32.xlu0 %v923, 64
        %v1278 = vpop.permute.xlu0 %1277
        %1279 = vrot.lane.b32.xlu0 %v924, 64
        %v1280 = vpop.permute.xlu0 %1279
        %1281 = vrot.lane.b32.xlu0 %v925, 64
        %v1282 = vpop.permute.xlu0 %1281
        %1283 = vrot.lane.b32.xlu0 %v926, 64
        %v1284 = vpop.permute.xlu0 %1283
        %1301 = vrot.lane.b32.xlu0 %v772, 64
        %v1302 = vpop.permute.xlu0 %1301
        %1303 = vrot.lane.b32.xlu0 %v773, 64
        %v1304 = vpop.permute.xlu0 %1303
        %1305 = vrot.lane.b32.xlu0 %v774, 64
        %v1306 = vpop.permute.xlu0 %1305
        %1307 = vrot.lane.b32.xlu0 %v775, 64
        %v1308 = vpop.permute.xlu0 %1307
        %1309 = vrot.lane.b32.xlu0 %v776, 64
        %v1310 = vpop.permute.xlu0 %1309
        %1311 = vrot.lane.b32.xlu0 %v777, 64
        %v1312 = vpop.permute.xlu0 %1311
        %1313 = vrot.lane.b32.xlu0 %v778, 64
        %v1314 = vpop.permute.xlu0 %1313
        %1315 = vrot.lane.b32.xlu0 %v779, 64
        %v1316 = vpop.permute.xlu0 %1315
        %1317 = vrot.lane.b32.xlu0 %v780, 64
        %v1318 = vpop.permute.xlu0 %1317
        %1319 = vrot.lane.b32.xlu0 %v781, 64
        %v1320 = vpop.permute.xlu0 %1319
        %1321 = vrot.lane.b32.xlu0 %v782, 64
        %v1322 = vpop.permute.xlu0 %1321
        %1323 = vrot.lane.b32.xlu0 %v783, 64
        %v1324 = vpop.permute.xlu0 %1323
        %1325 = vrot.lane.b32.xlu0 %v784, 64
        %v1326 = vpop.permute.xlu0 %1325
        %1327 = vrot.lane.b32.xlu0 %v785, 64
        %v1328 = vpop.permute.xlu0 %1327
        %1329 = vrot.lane.b32.xlu0 %v786, 64
        %v1330 = vpop.permute.xlu0 %1329
        %1331 = vrot.lane.b32.xlu0 %v787, 64
        %v1332 = vpop.permute.xlu0 %1331
        %v1334 = vsel %vm369, %v1278, 0
        %v1337 = vsel %vm369, %v1280, 0
        %v1340 = vsel %vm369, %v1282, 0
        %v1343 = vsel %vm369, %v1284, 0
        %v1346 = vsel %vm369, %v1302, 0
        %v1349 = vsel %vm369, %v1304, 0
        %v1352 = vsel %vm369, %v1306, 0
        %v1355 = vsel %vm369, %v1308, 0
        %v1358 = vsel %vm369, %v1310, 0
        %v1361 = vsel %vm369, %v1312, 0
        %v1364 = vsel %vm369, %v1314, 0
        %v1367 = vsel %vm369, %v1316, 0
        %v1370 = vsel %vm369, %v1318, 0
        %v1373 = vsel %vm369, %v1320, 0
        %v1376 = vsel %vm369, %v1322, 0
        %v1379 = vsel %vm369, %v1324, 0
        %v1382 = vsel %vm369, %v1326, 0
        %v1385 = vsel %vm369, %v1328, 0
        %v1388 = vsel %vm369, %v1330, 0
        %v1391 = vsel %vm369, %v1332, 0
        %1393 = vmatprep.subr.bf16.mxu0 0
        %1394 = vmatpush1.bf16.xpose.msra.mxu0 %v1367
        %1395 = vmatprep.subr.bf16.mxu0 0
        %1396 = vmatpush1.bf16.xpose.msra.mxu0 %v1364
        %1397 = vmatprep.subr.bf16.mxu0 0
        %1398 = vmatpush1.bf16.xpose.msra.mxu0 %v1361
        %1399 = vmatprep.subr.bf16.mxu0 0
        %1400 = vmatpush1.bf16.xpose.msra.mxu0 %v1358
        %1401 = vmatprep.subr.bf16.mxu0 0
        %1402 = vmatpush1.bf16.xpose.msra.mxu0 %v1355
        %1403 = vmatprep.subr.bf16.mxu0 0
        %1404 = vmatpush1.bf16.xpose.msra.mxu0 %v1352
        %1405 = vmatprep.subr.bf16.mxu0 0
        %1406 = vmatpush1.bf16.xpose.msra.mxu0 %v1349
        %1407 = vmatprep.subr.bf16.mxu0 0
        %1408 = vmatpush1.bf16.xpose.msra.mxu0 %v1346
        %1409 = vmatprep.subr.bf16.mxu0 0
        %1410 = vmatpush2.bf16.xpose.msra.mxu0 %v1391
        %1411 = vmatprep.subr.bf16.mxu0 0
        %1412 = vmatpush2.bf16.xpose.msra.mxu0 %v1388
        %1413 = vmatprep.subr.bf16.mxu0 0
        %1414 = vmatpush2.bf16.xpose.msra.mxu0 %v1385
        %1415 = vmatprep.subr.bf16.mxu0 0
        %1416 = vmatpush2.bf16.xpose.msra.mxu0 %v1382
        %1417 = vmatprep.subr.bf16.mxu0 0
        %1418 = vmatpush2.bf16.xpose.msra.mxu0 %v1379
        %1419 = vmatprep.subr.bf16.mxu0 0
        %1420 = vmatpush2.bf16.xpose.msra.mxu0 %v1376
        %1421 = vmatprep.subr.bf16.mxu0 0
        %1422 = vmatpush2.bf16.xpose.msra.mxu0 %v1373
        %1423 = vmatprep.subr.bf16.mxu0 0
        %1424 = vmatpush2.bf16.xpose.msra.mxu0 %v1370
        %1425 = vmatprep.mubr.bf16.mxu0 0
        %1426 = vmatmul.mubr.bf16.gmra.mxu0 %v1334
        %v1427 = vpop.f32.mrf.mxu0
        %v1428 = vadd.f32 0.0, %v1427
        %v1429 = vpop.f32.mrf.mxu0
        %v1430 = vadd.f32 0.0, %v1429
        %v1431 = vpop.f32.mrf.mxu0
        %v1432 = vadd.f32 0.0, %v1431
        %v1433 = vpop.f32.mrf.mxu0
        %v1434 = vadd.f32 0.0, %v1433
        %1435 = vmatprep.mubr.bf16.mxu0 0
        %1436 = vmatmul.mubr.bf16.gmra.mxu0 %v1337
        %v1437 = vpop.f32.mrf.mxu0
        %v1438 = vadd.f32 0.0, %v1437
        %v1439 = vpop.f32.mrf.mxu0
        %v1440 = vadd.f32 0.0, %v1439
        %v1441 = vpop.f32.mrf.mxu0
        %v1442 = vadd.f32 0.0, %v1441
        %v1443 = vpop.f32.mrf.mxu0
        %v1444 = vadd.f32 0.0, %v1443
        %1445 = vmatprep.mubr.bf16.mxu0 0
        %1446 = vmatmul.mubr.bf16.gmra.mxu0 %v1340
        %v1447 = vpop.f32.mrf.mxu0
        %v1448 = vadd.f32 0.0, %v1447
        %v1449 = vpop.f32.mrf.mxu0
        %v1450 = vadd.f32 0.0, %v1449
        %v1451 = vpop.f32.mrf.mxu0
        %v1452 = vadd.f32 0.0, %v1451
        %v1453 = vpop.f32.mrf.mxu0
        %v1454 = vadd.f32 0.0, %v1453
        %1455 = vmatprep.mubr.bf16.mxu0 0
        %1456 = vmatmul.mubr.bf16.gmra.mxu0 %v1343
        %v1457 = vpop.f32.mrf.mxu0
        %v1458 = vadd.f32 0.0, %v1457
        %v1459 = vpop.f32.mrf.mxu0
        %v1460 = vadd.f32 0.0, %v1459
        %v1461 = vpop.f32.mrf.mxu0
        %v1462 = vadd.f32 0.0, %v1461
        %v1463 = vpop.f32.mrf.mxu0
        %v1464 = vadd.f32 0.0, %v1463
        %1465 = vdwg.mxu0
        %v1466 = vmax.f32 %v1428, %v1430
        %1467 = vmax.xlane.f32.xlu0 %v1466
        %v1468 = vpop.xlane.xlu0 %1467
        %v1469 = vmax.f32 %v1432, %v1434
        %1470 = vmax.xlane.f32.xlu0 %v1469
        %v1471 = vpop.xlane.xlu0 %1470
        %v1472 = vmax.f32 %v1438, %v1440
        %1473 = vmax.xlane.f32.xlu0 %v1472
        %v1474 = vpop.xlane.xlu0 %1473
        %v1475 = vmax.f32 %v1442, %v1444
        %1476 = vmax.xlane.f32.xlu0 %v1475
        %v1477 = vpop.xlane.xlu0 %1476
        %v1478 = vmax.f32 %v1448, %v1450
        %1479 = vmax.xlane.f32.xlu0 %v1478
        %v1480 = vpop.xlane.xlu0 %1479
        %v1481 = vmax.f32 %v1452, %v1454
        %1482 = vmax.xlane.f32.xlu0 %v1481
        %v1483 = vpop.xlane.xlu0 %1482
        %v1484 = vmax.f32 %v1458, %v1460
        %1485 = vmax.xlane.f32.xlu0 %v1484
        %v1486 = vpop.xlane.xlu0 %1485
        %v1487 = vmax.f32 %v1462, %v1464
        %1488 = vmax.xlane.f32.xlu0 %v1487
        %v1489 = vpop.xlane.xlu0 %1488
        %v1490 = vsub.f32 %v1428, %v1468
        %v1491 = vsub.f32 %v1430, %v1468
        %v1492 = vsub.f32 %v1432, %v1471
        %v1493 = vsub.f32 %v1434, %v1471
        %v1494 = vsub.f32 %v1438, %v1474
        %v1495 = vsub.f32 %v1440, %v1474
        %v1496 = vsub.f32 %v1442, %v1477
        %v1497 = vsub.f32 %v1444, %v1477
        %v1498 = vsub.f32 %v1448, %v1480
        %v1499 = vsub.f32 %v1450, %v1480
        %v1500 = vsub.f32 %v1452, %v1483
        %v1501 = vsub.f32 %v1454, %v1483
        %v1502 = vsub.f32 %v1458, %v1486
        %v1503 = vsub.f32 %v1460, %v1486
        %v1504 = vsub.f32 %v1462, %v1489
        %v1505 = vsub.f32 %v1464, %v1489
        %v1506 = vmul.f32 %v1490, 1.442695
        %v1507 = vpow.pop %v1506
        %v1508 = vmul.f32 %v1491, 1.442695
        %v1509 = vpow.pop %v1508
        %v1510 = vmul.f32 %v1492, 1.442695
        %v1511 = vpow.pop %v1510
        %v1512 = vmul.f32 %v1493, 1.442695
        %v1513 = vpow.pop %v1512
        %v1514 = vmul.f32 %v1494, 1.442695
        %v1515 = vpow.pop %v1514
        %v1516 = vmul.f32 %v1495, 1.442695
        %v1517 = vpow.pop %v1516
        %v1518 = vmul.f32 %v1496, 1.442695
        %v1519 = vpow.pop %v1518
        %v1520 = vmul.f32 %v1497, 1.442695
        %v1521 = vpow.pop %v1520
        %v1522 = vmul.f32 %v1498, 1.442695
        %v1523 = vpow.pop %v1522
        %v1524 = vmul.f32 %v1499, 1.442695
        %v1525 = vpow.pop %v1524
        %v1526 = vmul.f32 %v1500, 1.442695
        %v1527 = vpow.pop %v1526
        %v1528 = vmul.f32 %v1501, 1.442695
        %v1529 = vpow.pop %v1528
        %v1530 = vmul.f32 %v1502, 1.442695
        %v1531 = vpow.pop %v1530
        %v1532 = vmul.f32 %v1503, 1.442695
        %v1533 = vpow.pop %v1532
        %v1534 = vmul.f32 %v1504, 1.442695
        %v1535 = vpow.pop %v1534
        %v1536 = vmul.f32 %v1505, 1.442695
        %v1537 = vpow.pop %v1536
        %v1538 = vadd.f32 %v1507, %v1509
        %1539 = vadd.xlane.f32.xlu0 %v1538
        %v1540 = vpop.xlane.xlu0 %1539
        %v1541 = vadd.f32 %v1511, %v1513
        %1542 = vadd.xlane.f32.xlu0 %v1541
        %v1543 = vpop.xlane.xlu0 %1542
        %v1544 = vadd.f32 %v1515, %v1517
        %1545 = vadd.xlane.f32.xlu0 %v1544
        %v1546 = vpop.xlane.xlu0 %1545
        %v1547 = vadd.f32 %v1519, %v1521
        %1548 = vadd.xlane.f32.xlu0 %v1547
        %v1549 = vpop.xlane.xlu0 %1548
        %v1550 = vadd.f32 %v1523, %v1525
        %1551 = vadd.xlane.f32.xlu0 %v1550
        %v1552 = vpop.xlane.xlu0 %1551
        %v1553 = vadd.f32 %v1527, %v1529
        %1554 = vadd.xlane.f32.xlu0 %v1553
        %v1555 = vpop.xlane.xlu0 %1554
        %v1556 = vadd.f32 %v1531, %v1533
        %1557 = vadd.xlane.f32.xlu0 %v1556
        %v1558 = vpop.xlane.xlu0 %1557
        %v1559 = vadd.f32 %v1535, %v1537
        %1560 = vadd.xlane.f32.xlu0 %v1559
        %v1561 = vpop.xlane.xlu0 %1560
        %v1562 = vrcp.pop %v1540
        %v1563 = vrcp.pop %v1543
        %v1564 = vrcp.pop %v1546
        %v1565 = vrcp.pop %v1549
        %v1566 = vrcp.pop %v1552
        %v1567 = vrcp.pop %v1555
        %v1568 = vrcp.pop %v1558
        %v1569 = vrcp.pop %v1561
        %v1570 = vmul.f32 %v1507, %v1562
        %v1571 = vmul.f32 %v1509, %v1562
        %v1572 = vmul.f32 %v1511, %v1563
        %v1573 = vmul.f32 %v1513, %v1563
        %v1574 = vmul.f32 %v1515, %v1564
        %v1575 = vmul.f32 %v1517, %v1564
        %v1576 = vmul.f32 %v1519, %v1565
        %v1577 = vmul.f32 %v1521, %v1565
        %v1578 = vmul.f32 %v1523, %v1566
        %v1579 = vmul.f32 %v1525, %v1566
        %v1580 = vmul.f32 %v1527, %v1567
        %v1581 = vmul.f32 %v1529, %v1567
        %v1582 = vmul.f32 %v1531, %v1568
        %v1583 = vmul.f32 %v1533, %v1568
        %v1584 = vmul.f32 %v1535, %v1569
        %v1585 = vmul.f32 %v1537, %v1569
        %v1586 = vpack.c.bf16 %v1572, %v1570
        %v1587 = vpack.c.bf16 %v1573, %v1571
        %v1588 = vpack.c.bf16 %v1576, %v1574
        %v1589 = vpack.c.bf16 %v1577, %v1575
        %v1590 = vpack.c.bf16 %v1580, %v1578
        %v1591 = vpack.c.bf16 %v1581, %v1579
        %v1592 = vpack.c.bf16 %v1584, %v1582
        %v1593 = vpack.c.bf16 %v1585, %v1583
        %1610 = vrot.lane.b32.xlu0 %v788, 64
        %v1611 = vpop.permute.xlu0 %1610
        %1612 = vrot.lane.b32.xlu0 %v789, 64
        %v1613 = vpop.permute.xlu0 %1612
        %1614 = vrot.lane.b32.xlu0 %v790, 64
        %v1615 = vpop.permute.xlu0 %1614
        %1616 = vrot.lane.b32.xlu0 %v791, 64
        %v1617 = vpop.permute.xlu0 %1616
        %1618 = vrot.lane.b32.xlu0 %v792, 64
        %v1619 = vpop.permute.xlu0 %1618
        %1620 = vrot.lane.b32.xlu0 %v793, 64
        %v1621 = vpop.permute.xlu0 %1620
        %1622 = vrot.lane.b32.xlu0 %v794, 64
        %v1623 = vpop.permute.xlu0 %1622
        %1624 = vrot.lane.b32.xlu0 %v795, 64
        %v1625 = vpop.permute.xlu0 %1624
        %1626 = vrot.lane.b32.xlu0 %v796, 64
        %v1627 = vpop.permute.xlu0 %1626
        %1628 = vrot.lane.b32.xlu0 %v797, 64
        %v1629 = vpop.permute.xlu0 %1628
        %1630 = vrot.lane.b32.xlu0 %v798, 64
        %v1631 = vpop.permute.xlu0 %1630
        %1632 = vrot.lane.b32.xlu0 %v799, 64
        %v1633 = vpop.permute.xlu0 %1632
        %1634 = vrot.lane.b32.xlu0 %v800, 64
        %v1635 = vpop.permute.xlu0 %1634
        %1636 = vrot.lane.b32.xlu0 %v801, 64
        %v1637 = vpop.permute.xlu0 %1636
        %1638 = vrot.lane.b32.xlu0 %v802, 64
        %v1639 = vpop.permute.xlu0 %1638
        %1640 = vrot.lane.b32.xlu0 %v803, 64
        %v1641 = vpop.permute.xlu0 %1640
        %1658 = vmatprep.subr.bf16.mxu0 0
        %1659 = vmatpush1.bf16.msra.mxu0 %v1625
        %1660 = vmatprep.subr.bf16.mxu0 0
        %1661 = vmatpush1.bf16.msra.mxu0 %v1623
        %1662 = vmatprep.subr.bf16.mxu0 0
        %1663 = vmatpush1.bf16.msra.mxu0 %v1621
        %1664 = vmatprep.subr.bf16.mxu0 0
        %1665 = vmatpush1.bf16.msra.mxu0 %v1619
        %1666 = vmatprep.subr.bf16.mxu0 0
        %1667 = vmatpush1.bf16.msra.mxu0 %v1617
        %1668 = vmatprep.subr.bf16.mxu0 0
        %1669 = vmatpush1.bf16.msra.mxu0 %v1615
        %1670 = vmatprep.subr.bf16.mxu0 0
        %1671 = vmatpush1.bf16.msra.mxu0 %v1613
        %1672 = vmatprep.subr.bf16.mxu0 0
        %1673 = vmatpush1.bf16.msra.mxu0 %v1611
        %1674 = vmatprep.subr.bf16.mxu0 0
        %1675 = vmatpush2.bf16.msra.mxu0 %v1641
        %1676 = vmatprep.subr.bf16.mxu0 0
        %1677 = vmatpush2.bf16.msra.mxu0 %v1639
        %1678 = vmatprep.subr.bf16.mxu0 0
        %1679 = vmatpush2.bf16.msra.mxu0 %v1637
        %1680 = vmatprep.subr.bf16.mxu0 0
        %1681 = vmatpush2.bf16.msra.mxu0 %v1635
        %1682 = vmatprep.subr.bf16.mxu0 0
        %1683 = vmatpush2.bf16.msra.mxu0 %v1633
        %1684 = vmatprep.subr.bf16.mxu0 0
        %1685 = vmatpush2.bf16.msra.mxu0 %v1631
        %1686 = vmatprep.subr.bf16.mxu0 0
        %1687 = vmatpush2.bf16.msra.mxu0 %v1629
        %1688 = vmatprep.subr.bf16.mxu0 0
        %1689 = vmatpush2.bf16.msra.mxu0 %v1627
        %1690 = vmatprep.mubr.bf16.mxu0 %v1587
        %1691 = vmatmul.mubr.bf16.gmra.mxu0 %v1586
        %v1692 = vpop.f32.mrf.mxu0
        %v1693 = vadd.f32 0.0, %v1692
        %v1694 = vpop.f32.mrf.mxu0
        %v1695 = vpop.f32.mrf.mxu0
        %v1696 = vadd.f32 0.0, %v1695
        %v1697 = vpop.f32.mrf.mxu0
        %1698 = vmatprep.mubr.bf16.mxu0 %v1589
        %1699 = vmatmul.mubr.bf16.gmra.mxu0 %v1588
        %v1700 = vpop.f32.mrf.mxu0
        %v1701 = vadd.f32 0.0, %v1700
        %v1702 = vpop.f32.mrf.mxu0
        %v1703 = vpop.f32.mrf.mxu0
        %v1704 = vadd.f32 0.0, %v1703
        %v1705 = vpop.f32.mrf.mxu0
        %1706 = vmatprep.mubr.bf16.mxu0 %v1591
        %1707 = vmatmul.mubr.bf16.gmra.mxu0 %v1590
        %v1708 = vpop.f32.mrf.mxu0
        %v1709 = vadd.f32 0.0, %v1708
        %v1710 = vpop.f32.mrf.mxu0
        %v1711 = vpop.f32.mrf.mxu0
        %v1712 = vadd.f32 0.0, %v1711
        %v1713 = vpop.f32.mrf.mxu0
        %1714 = vmatprep.mubr.bf16.mxu0 %v1593
        %1715 = vmatmul.mubr.bf16.gmra.mxu0 %v1592
        %v1716 = vpop.f32.mrf.mxu0
        %v1717 = vadd.f32 0.0, %v1716
        %v1718 = vpop.f32.mrf.mxu0
        %v1719 = vpop.f32.mrf.mxu0
        %v1720 = vadd.f32 0.0, %v1719
        %v1721 = vpop.f32.mrf.mxu0
        %1722 = vdwg.mxu0
        %v1723 = vpack.c.bf16 %v1696, %v1693
        %v1724 = vpack.c.bf16 %v1704, %v1701
        %v1725 = vpack.c.bf16 %v1712, %v1709
        %v1726 = vpack.c.bf16 %v1720, %v1717
        %v1735 = vunpack.c.l.b16 %v935
        %v1736 = vunpack.c.l.b16 %v936
        %v1737 = vunpack.c.l.b16 %v937
        %v1738 = vunpack.c.l.b16 %v938
        %v1739 = vunpack.c.l.b16 %v939
        %v1740 = vunpack.c.l.b16 %v940
        %v1741 = vunpack.c.l.b16 %v941
        %v1742 = vunpack.c.l.b16 %v942
        %v1743 = vpack.c.b16 %v1736, %v1735
        %v1744 = vpack.c.b16 %v1738, %v1737
        %v1745 = vpack.c.b16 %v1740, %v1739
        %v1746 = vpack.c.b16 %v1742, %v1741
        %v1752 = vsel %vm369, %v1723, 0
        %v1755 = vsel %vm369, %v1724, 0
        %v1758 = vsel %vm369, %v1725, 0
        %v1761 = vsel %vm369, %v1726, 0
        %1763 = vmatprep.subr.bf16.mxu0 0
        %1764 = vmatpush1.bf16.msra.mxu0 0
        %1765 = vmatprep.subr.bf16.mxu0 0
        %1766 = vmatpush1.bf16.msra.mxu0 0
        %1767 = vmatprep.subr.bf16.mxu0 0
        %1768 = vmatpush1.bf16.msra.mxu0 0
        %1769 = vmatprep.subr.bf16.mxu0 0
        %1770 = vmatpush1.bf16.msra.mxu0 0
        %1771 = vmatprep.subr.bf16.mxu0 0
        %1772 = vmatpush1.bf16.msra.mxu0 %v1746
        %1773 = vmatprep.subr.bf16.mxu0 0
        %1774 = vmatpush1.bf16.msra.mxu0 %v1745
        %1775 = vmatprep.subr.bf16.mxu0 0
        %1776 = vmatpush1.bf16.msra.mxu0 %v1744
        %1777 = vmatprep.subr.bf16.mxu0 0
        %1778 = vmatpush1.bf16.msra.mxu0 %v1743
        %1779 = vmatprep.subr.bf16.mxu0 0
        %1780 = vmatpush2.bf16.msra.mxu0 0
        %1781 = vmatprep.subr.bf16.mxu0 0
        %1782 = vmatpush2.bf16.msra.mxu0 0
        %1783 = vmatprep.subr.bf16.mxu0 0
        %1784 = vmatpush2.bf16.msra.mxu0 0
        %1785 = vmatprep.subr.bf16.mxu0 0
        %1786 = vmatpush2.bf16.msra.mxu0 0
        %1787 = vmatprep.subr.bf16.mxu0 0
        %1788 = vmatpush2.bf16.msra.mxu0 0
        %1789 = vmatprep.subr.bf16.mxu0 0
        %1790 = vmatpush2.bf16.msra.mxu0 0
        %1791 = vmatprep.subr.bf16.mxu0 0
        %1792 = vmatpush2.bf16.msra.mxu0 0
        %1793 = vmatprep.subr.bf16.mxu0 0
        %1794 = vmatpush2.bf16.msra.mxu0 0
        %1795 = vmatprep.mubr.bf16.mxu0 0
        %1796 = vmatmul.mubr.bf16.gmra.mxu0 %v1752
        %v1797 = vpop.f32.mrf.mxu0
        %v1798 = vadd.f32 0.0, %v1797
        %v1799 = vpop.f32.mrf.mxu0
        %v1800 = vpop.f32.mrf.mxu0
        %v1801 = vadd.f32 0.0, %v1800
        %v1802 = vpop.f32.mrf.mxu0
        %1803 = vmatprep.mubr.bf16.mxu0 0
        %1804 = vmatmul.mubr.bf16.gmra.mxu0 %v1755
        %v1805 = vpop.f32.mrf.mxu0
        %v1806 = vadd.f32 0.0, %v1805
        %v1807 = vpop.f32.mrf.mxu0
        %v1808 = vpop.f32.mrf.mxu0
        %v1809 = vadd.f32 0.0, %v1808
        %v1810 = vpop.f32.mrf.mxu0
        %1811 = vmatprep.mubr.bf16.mxu0 0
        %1812 = vmatmul.mubr.bf16.gmra.mxu0 %v1758
        %v1813 = vpop.f32.mrf.mxu0
        %v1814 = vadd.f32 0.0, %v1813
        %v1815 = vpop.f32.mrf.mxu0
        %v1816 = vpop.f32.mrf.mxu0
        %v1817 = vadd.f32 0.0, %v1816
        %v1818 = vpop.f32.mrf.mxu0
        %1819 = vmatprep.mubr.bf16.mxu0 0
        %1820 = vmatmul.mubr.bf16.gmra.mxu0 %v1761
        %v1821 = vpop.f32.mrf.mxu0
        %v1822 = vadd.f32 0.0, %v1821
        %v1823 = vpop.f32.mrf.mxu0
        %v1824 = vpop.f32.mrf.mxu0
        %v1825 = vadd.f32 0.0, %v1824
        %v1826 = vpop.f32.mrf.mxu0
        %1827 = vdwg.mxu0
        %v1836 = vunpack.c.l.b16 %v927
        %v1837 = vunpack.c.l.b16 %v928
        %v1838 = vunpack.c.l.b16 %v929
        %v1839 = vunpack.c.l.b16 %v930
        %v1840 = vunpack.c.l.b16 %v931
        %v1841 = vunpack.c.l.b16 %v932
        %v1842 = vunpack.c.l.b16 %v933
        %v1843 = vunpack.c.l.b16 %v934
        %v1844 = vpack.c.b16 %v1837, %v1836
        %v1845 = vpack.c.b16 %v1839, %v1838
        %v1846 = vpack.c.b16 %v1841, %v1840
        %v1847 = vpack.c.b16 %v1843, %v1842
        %v1853 = vsel %vm369, %v1269, 0
        %v1856 = vsel %vm369, %v1270, 0
        %v1859 = vsel %vm369, %v1271, 0
        %v1862 = vsel %vm369, %v1272, 0
        %1864 = vmatprep.subr.bf16.mxu0 0
        %1865 = vmatpush1.bf16.msra.mxu0 0
        %1866 = vmatprep.subr.bf16.mxu0 0
        %1867 = vmatpush1.bf16.msra.mxu0 0
        %1868 = vmatprep.subr.bf16.mxu0 0
        %1869 = vmatpush1.bf16.msra.mxu0 0
        %1870 = vmatprep.subr.bf16.mxu0 0
        %1871 = vmatpush1.bf16.msra.mxu0 0
        %1872 = vmatprep.subr.bf16.mxu0 0
        %1873 = vmatpush1.bf16.msra.mxu0 %v1847
        %1874 = vmatprep.subr.bf16.mxu0 0
        %1875 = vmatpush1.bf16.msra.mxu0 %v1846
        %1876 = vmatprep.subr.bf16.mxu0 0
        %1877 = vmatpush1.bf16.msra.mxu0 %v1845
        %1878 = vmatprep.subr.bf16.mxu0 0
        %1879 = vmatpush1.bf16.msra.mxu0 %v1844
        %1880 = vmatprep.subr.bf16.mxu0 0
        %1881 = vmatpush2.bf16.msra.mxu0 0
        %1882 = vmatprep.subr.bf16.mxu0 0
        %1883 = vmatpush2.bf16.msra.mxu0 0
        %1884 = vmatprep.subr.bf16.mxu0 0
        %1885 = vmatpush2.bf16.msra.mxu0 0
        %1886 = vmatprep.subr.bf16.mxu0 0
        %1887 = vmatpush2.bf16.msra.mxu0 0
        %1888 = vmatprep.subr.bf16.mxu0 0
        %1889 = vmatpush2.bf16.msra.mxu0 0
        %1890 = vmatprep.subr.bf16.mxu0 0
        %1891 = vmatpush2.bf16.msra.mxu0 0
        %1892 = vmatprep.subr.bf16.mxu0 0
        %1893 = vmatpush2.bf16.msra.mxu0 0
        %1894 = vmatprep.subr.bf16.mxu0 0
        %1895 = vmatpush2.bf16.msra.mxu0 0
        %1896 = vmatprep.mubr.bf16.mxu0 0
        %1897 = vmatmul.mubr.bf16.gmra.mxu0 %v1853
        %v1898 = vpop.f32.mrf.mxu0
        %v1899 = vadd.f32 %v1798, %v1898
        %v1900 = vpop.f32.mrf.mxu0
        %v1901 = vpop.f32.mrf.mxu0
        %v1902 = vadd.f32 %v1801, %v1901
        %v1903 = vpop.f32.mrf.mxu0
        %1904 = vmatprep.mubr.bf16.mxu0 0
        %1905 = vmatmul.mubr.bf16.gmra.mxu0 %v1856
        %v1906 = vpop.f32.mrf.mxu0
        %v1907 = vadd.f32 %v1806, %v1906
        %v1908 = vpop.f32.mrf.mxu0
        %v1909 = vpop.f32.mrf.mxu0
        %v1910 = vadd.f32 %v1809, %v1909
        %v1911 = vpop.f32.mrf.mxu0
        %1912 = vmatprep.mubr.bf16.mxu0 0
        %1913 = vmatmul.mubr.bf16.gmra.mxu0 %v1859
        %v1914 = vpop.f32.mrf.mxu0
        %v1915 = vadd.f32 %v1814, %v1914
        %v1916 = vpop.f32.mrf.mxu0
        %v1917 = vpop.f32.mrf.mxu0
        %v1918 = vadd.f32 %v1817, %v1917
        %v1919 = vpop.f32.mrf.mxu0
        %1920 = vmatprep.mubr.bf16.mxu0 0
        %1921 = vmatmul.mubr.bf16.gmra.mxu0 %v1862
        %v1922 = vpop.f32.mrf.mxu0
        %v1923 = vadd.f32 %v1822, %v1922
        %v1924 = vpop.f32.mrf.mxu0
        %v1925 = vpop.f32.mrf.mxu0
        %v1926 = vadd.f32 %v1825, %v1925
        %v1927 = vpop.f32.mrf.mxu0
        %1928 = vdwg.mxu0
        %v1929 = vld [vmem:[%s4] sm:$0x1]
        %v1931 = vlaneseq
        %v1932 = vshrl.u32 %v1931, 7
        %v1933 = vsub.s32 0, %v1932
        %v1934 = vrot.slane %v1929, %v1933
        %v1936 = vadd.f32 %v1899, %v1934
        %v1937 = vadd.f32 %v1902, %v1934
        %v1938 = vadd.f32 %v1907, %v1934
        %v1939 = vadd.f32 %v1910, %v1934
        %v1940 = vadd.f32 %v1915, %v1934
        %v1941 = vadd.f32 %v1918, %v1934
        %v1942 = vadd.f32 %v1923, %v1934
        %v1943 = vadd.f32 %v1926, %v1934
        %1944 = vst [vmem:[%s217] sm:$0xff] %v1936
        %1945 = vst [vmem:[%s217 + $0x8] sm:$0xff] %v1937
        %1946 = vst [vmem:[%s217 + $0x10] sm:$0xff] %v1938
        %1947 = vst [vmem:[%s217 + $0x18] sm:$0xff] %v1939
        %1948 = vst [vmem:[%s217 + $0x20] sm:$0xff] %v1940
        %1949 = vst [vmem:[%s217 + $0x28] sm:$0xff] %v1941
        %1950 = vst [vmem:[%s217 + $0x30] sm:$0xff] %v1942
        %1951 = vst [vmem:[%s217 + $0x38] sm:$0xff] %v1943
        %s1952 = sand.u32 %s137, 1
        %s1953 = scalar_lea.sflag [#allocation4], %s1952
        %s1954 = sand.u32 %s137, 1
        %s1955 = smul.addr %s1954, 64
        %s1956 = scalar_lea.vmem [#allocation3], %s1955
        // Predicated region
        $region41: #{pooled_self_attention.1} parent=39 // pred_check
          %p1957 = pneg %p147
        $region42: #{pooled_self_attention.1} parent=39 // pred_check_branch
          %1959 = sbr.rel (%p1957) target = $region44
        $region43: #{pooled_self_attention.1} parent=39 // pred_region
          %s1961 = ssub.s32 1024, 1024
          %1962 = vsyncadd %s1953, %s1961
          %s1963 = smul.addr %s19, 8
          %s1964 = smul.addr %s1963, 128
          %s1965 = scalar_lea.hbm %s5, %s1964
          %s1966 = sshll.u32 %s1956, 4
          %s1967 = int_to_ptr.vmem [resolvable:$true] %s1966
          %1972 = dma.vmem_to_hbm [thread:$0]  %s1967, 1024, %s1965, %s1953, 128, 128, 8
        $region44: #{pooled_self_attention.1} parent=39 // pred_fallthru
          _
      $region40: #{pooled_self_attention.1} parent=5 // pred_fallthru
        _
      %p1973 = scmp.le.s32.totalorder 2, %s14
      // Predicated region
      $region45: #{pooled_self_attention.1} parent=5 // pred_check
        %p1974 = pneg %p1973
      $region46: #{pooled_self_attention.1} parent=5 // pred_check_branch
        %1976 = sbr.rel (%p1974) target = $region48
      $region47: #{pooled_self_attention.1} parent=5 // pred_region
        %s1977 = ssub.s32 %s14, 2
        // Predicated region
        $region49: #{pooled_self_attention.1} parent=47 // pred_check
          %p1978 = pneg %p153
        $region50: #{pooled_self_attention.1} parent=47 // pred_check_branch
          %1980 = sbr.rel (%p1978) target = $region52
        $region51: #{pooled_self_attention.1} parent=47 // pred_region
          %s1981 = sand.u32 %s138, 1
          %s1982 = scalar_lea.sflag [#allocation4], %s1981
          %s1983 = sand.u32 %s138, 1
          %s1984 = smul.addr %s1983, 64
          %s1985 = scalar_lea.vmem [#allocation3], %s1984
          %1986 = dma.done %s1982, 1024
        $region52: #{pooled_self_attention.1} parent=47 // pred_fallthru
          _
      $region48: #{pooled_self_attention.1} parent=5 // pred_fallthru
        _
    $region6: #{pooled_self_attention.1} parent=1 // loop_footer
      %s18 = sadd.s32 1, %s14
    $region7: #{pooled_self_attention.1} parent=1 // loop_footer_branch
      %13 = sbr.rel target = $region3
    $region8: #{pooled_self_attention.1} parent=1 // loop_exit
      _
    %1987 = vsyncpa [#allocation4], 1
    %s1988 = scalar_lea.sflag [#allocation4], 1
    %1989 = vsyncpa %s1988, 1

</llo_original>
